<compile_context>
chip_gen: v5e
topology: v5e:2x2
jax: 0.10.0
libtpu: 0.0.40
codegen_flags: <defaults>
</compile_context>

<pallas_src>
import functools

import jax
import jax.numpy as jnp
import numpy as np
from jax import lax
from jax.experimental import pallas as pl
from jax.experimental.pallas import tpu as pltpu


# ----------------------------- in-kernel helpers -----------------------------

def _mish(v, approx_recip):
    """x * tanh(softplus(x)) via the exp identity (1 EUP exp + reciprocal)."""
    u = jnp.exp(jnp.minimum(v, 20.0))   # for x > 20, tanh(softplus(x)) == 1 in f32
    s = u * (u + 2.0)
    if approx_recip:
        tsp = s * pl.reciprocal(s + 2.0, approx=True)
    else:
        tsp = s / (s + 2.0)
    return v * tsp


def _conv_gn_mish(x, w3, b, gn_w, gn_b, gmask, gmask_t, m_first, m_last,
                  bb, t, mm_dtype, approx_recip, eps=1e-5):
    """Conv1d(k=3, pad=1) + GroupNorm + Mish on batch-folded rows.

    x:        [Bb*T, Cin] f32, rows ordered batch-major / time-minor
    w3:       [3*Cin, Cout] tap-major conv weights (matmul dtype)
    b, gn_w, gn_b: [1, Cout] f32
    gmask:    [Cout, G] one-hot channel->group (f32); gmask_t: [G, Cout]
    m_first:  [Bb*T, 1] f32, 0.0 at rows with t == 0   (left pad)
    m_last:   [Bb*T, 1] f32, 0.0 at rows with t == T-1 (right pad)
    returns:  [Bb*T, Cout] f32
    """
    bt = x.shape[0]
    cout = w3.shape[1]
    g = gmask.shape[1]

    # Shifted taps on the XLU; zero the rows that wrapped across a sequence
    # (== batch element) boundary via the precomputed masks.
    x_m1 = pltpu.roll(x, shift=1, axis=0) * m_first
    x_p1 = pltpu.roll(x, shift=bt - 1, axis=0) * m_last

    # Single fused MXU matmul over all three taps (K = 3*Cin), f32 accumulate.
    x3 = jnp.concatenate([x_m1, x, x_p1], axis=1).astype(mm_dtype)
    y = jnp.dot(x3, w3, preferred_element_type=jnp.float32) + b      # [BT, Cout]

    # GroupNorm: per-(sample, group) biased mean/var in f32.
    y3 = y.reshape(bb, t, cout)
    s_c = jnp.sum(y3, axis=1)                                        # [Bb, Cout]
    q_c = jnp.sum(y3 * y3, axis=1)                                   # [Bb, Cout]
    inv_n = 1.0 / float(t * (cout // g))
    s_g = jnp.dot(s_c, gmask, preferred_element_type=jnp.float32)    # [Bb, G]
    q_g = jnp.dot(q_c, gmask, preferred_element_type=jnp.float32)
    mean_g = s_g * inv_n
    var_g = jnp.maximum(q_g * inv_n - mean_g * mean_g, 0.0)          # clamp >= 0
    rstd_g = lax.rsqrt(var_g + eps)
    mean_c = jnp.dot(mean_g, gmask_t, preferred_element_type=jnp.float32)
    rstd_c = jnp.dot(rstd_g, gmask_t, preferred_element_type=jnp.float32)
    a = rstd_c * gn_w                                                # [Bb, Cout]
    bsh = gn_b - mean_c * a
    h3 = y3 * a[:, None, :] + bsh[:, None, :]
    return _mish(h3, approx_recip).reshape(bt, cout)


# --------------------------------- kernel ------------------------------------

def _cond_res_block_kernel(*refs, bb, t, cout, cond_predict_scale, has_res,
                           mm_dtype, approx_recip):
    it = iter(refs)
    x_ref = next(it)
    if cond_predict_scale:
        esc_ref, ebi_ref = next(it), next(it)
    else:
        e_ref = next(it)
    w0_ref, b0_ref, g0w_ref, g0b_ref = next(it), next(it), next(it), next(it)
    w1_ref, b1_ref, g1w_ref, g1b_ref = next(it), next(it), next(it), next(it)
    gm_ref, gmt_ref = next(it), next(it)
    mf_ref, ml_ref = next(it), next(it)
    if has_res:
        wr_ref, br_ref = next(it), next(it)
    o_ref = next(it)

    x = x_ref[0]                         # [Bb*T, Cin] f32
    gmask = gm_ref[...]
    gmask_t = gmt_ref[...]
    m_first = mf_ref[...]
    m_last = ml_ref[...]

    # Conv1dBlock 0: conv -> GroupNorm -> Mish
    h = _conv_gn_mish(x, w0_ref[...], b0_ref[...], g0w_ref[...], g0b_ref[...],
                      gmask, gmask_t, m_first, m_last, bb, t, mm_dtype,
                      approx_recip)

    # FiLM conditioning (cond encoder hoisted to the wrapper).
    h3 = h.reshape(bb, t, cout)
    if cond_predict_scale:
        h3 = esc_ref[0][:, None, :] * h3 + ebi_ref[0][:, None, :]
    else:
        h3 = h3 + e_ref[0][:, None, :]
    h = h3.reshape(bb * t, cout)

    # Conv1dBlock 1
    h = _conv_gn_mish(h, w1_ref[...], b1_ref[...], g1w_ref[...], g1b_ref[...],
                      gmask, gmask_t, m_first, m_last, bb, t, mm_dtype,
                      approx_recip)

    # Residual branch: 1x1 conv, or identity when in_channels == out_channels.
    if has_res:
        res = jnp.dot(x.astype(mm_dtype), wr_ref[...],
                      preferred_element_type=jnp.float32) + br_ref[...]
    else:
        res = x
    o_ref[0] = (h + res).astype(o_ref.dtype)


# --------------------------------- wrapper ------------------------------------

def _host_mish(v):
    return v * jnp.tanh(jax.nn.softplus(v))


def _pick_batch_block(batch, horizon):
    """Largest divisor of `batch` keeping >=2 grid steps and modest rows/step."""
    for d in range(batch, 0, -1):
        if batch % d:
            continue
        if d * horizon > 1024:
            continue
        if batch // d >= 2 or batch == 1:
            return d
    return 1


def conditional_residual_block_1d_ntc(x_ntc, cond, params, *, n_groups,
                                      cond_predict_scale,
                                      compute_dtype=jnp.bfloat16,
                                      batch_block=None):
    """x_ntc: [B, T, Cin], cond: [B, cond_dim] -> [B, T, Cout]."""
    b_sz, t, cin = x_ntc.shape
    cout, _, k = params["conv0_w"].shape
    assert k == 3, "kernel implements kernel_size=3 (module default)"
    assert cout % n_groups == 0
    f32 = jnp.float32
    mm_dtype = np.dtype(compute_dtype)
    approx_recip = mm_dtype != np.dtype(np.float32)

    bb = batch_block or _pick_batch_block(b_sz, t)
    assert b_sz % bb == 0
    n_blk = b_sz // bb
    bt = bb * t

    # Conv weights -> tap-major [3*Cin, Cout] matmul layout (matmul dtype).
    w0 = jnp.transpose(params["conv0_w"], (2, 1, 0)).reshape(k * cin, cout).astype(mm_dtype)
    w1 = jnp.transpose(params["conv1_w"], (2, 1, 0)).reshape(k * cout, cout).astype(mm_dtype)
    b0 = params["conv0_b"].reshape(1, cout).astype(f32)
    b1 = params["conv1_b"].reshape(1, cout).astype(f32)
    gn0w = params["gn0_w"].reshape(1, cout).astype(f32)
    gn0b = params["gn0_b"].reshape(1, cout).astype(f32)
    gn1w = params["gn1_w"].reshape(1, cout).astype(f32)
    gn1b = params["gn1_b"].reshape(1, cout).astype(f32)

    # cond encoder (Mish -> Linear) hoisted: one batched XLA matmul.
    e = _host_mish(cond.astype(f32)) @ params["lin_w"].T.astype(f32) \
        + params["lin_b"].astype(f32)                                 # [B, cond_ch]
    if cond_predict_scale:
        cond_arrays = [e[:, :cout].reshape(n_blk, bb, cout),
                       e[:, cout:].reshape(n_blk, bb, cout)]
    else:
        cond_arrays = [e.reshape(n_blk, bb, cout)]

    has_res = "res_w" in params
    if has_res:
        res_arrays = [params["res_w"][:, :, 0].T.astype(mm_dtype),     # [Cin, Cout]
                      params["res_b"].reshape(1, cout).astype(f32)]
    else:
        assert cin == cout, "identity residual requires in_channels == out_channels"
        res_arrays = []

    # One-hot channel->group map (contiguous groups, like torch.nn.GroupNorm).
    cg = cout // n_groups
    ch = np.arange(cout)
    gmask = jnp.asarray((ch[:, None] // cg) == np.arange(n_groups)[None, :],
                        dtype=np.float32)                              # [Cout, G]
    gmask_t = gmask.T

    # Boundary masks for the rolled conv taps (zero where the roll wrapped
    # across a sequence boundary).
    tpos = np.arange(bt) % t
    m_first = jnp.asarray((tpos != 0).astype(np.float32).reshape(bt, 1))
    m_last = jnp.asarray((tpos != t - 1).astype(np.float32).reshape(bt, 1))

    x_in = x_ntc.astype(f32).reshape(n_blk, bt, cin)

    full = lambda shape: pl.BlockSpec(shape, lambda i: (0,) * len(shape))
    blk3 = lambda s1, s2: pl.BlockSpec((1, s1, s2), lambda i: (i, 0, 0))

    # NOTE: for very large Cout on v7x (64 MiB VMEM), consider pl.Buffered(1)
    # on these grid-invariant weight specs to avoid double-buffering them.
    invariant = [w0, b0, gn0w, gn0b, w1, b1, gn1w, gn1b,
                 gmask, gmask_t, m_first, m_last] + res_arrays
    inputs = [x_in] + cond_arrays + invariant
    in_specs = ([blk3(bt, cin)]
                + [blk3(bb, cout)] * len(cond_arrays)
                + [full(a.shape) for a in invariant])

    kernel = functools.partial(
        _cond_res_block_kernel, bb=bb, t=t, cout=cout,
        cond_predict_scale=cond_predict_scale, has_res=has_res,
        mm_dtype=mm_dtype, approx_recip=approx_recip)

    out = pl.pallas_call(
        kernel,
        out_shape=jax.ShapeDtypeStruct((n_blk, bt, cout), f32),
        grid_spec=pltpu.PrefetchScalarGridSpec(
            num_scalar_prefetch=0,
            grid=(n_blk,),
            in_specs=in_specs,
            out_specs=blk3(bt, cout),
        ),
        compiler_params=pltpu.CompilerParams(
            dimension_semantics=("parallel",),
            vmem_limit_bytes=48 * 1024 * 1024,
        ),
    )(*inputs)

    return out.reshape(b_sz, t, cout)


def conditional_residual_block_1d(x, cond, params, *, n_groups,
                                  cond_predict_scale,
                                  compute_dtype=jnp.bfloat16,
                                  batch_block=None):
    """PyTorch layout: x [B, Cin, T], cond [B, cond_dim] -> [B, Cout, T]."""
    out_ntc = conditional_residual_block_1d_ntc(
        jnp.transpose(x, (0, 2, 1)), cond, params, n_groups=n_groups,
        cond_predict_scale=cond_predict_scale, compute_dtype=compute_dtype,
        batch_block=batch_block)
    return jnp.transpose(out_ntc, (0, 2, 1))


# ---------------------------- pure-JAX reference ------------------------------

def _ref_forward(x, cond, p, n_groups, cond_predict_scale):
    def mish(v):
        return v * jnp.tanh(jax.nn.softplus(v))

    def conv1d(x, w, b, pad):
        y = lax.conv_general_dilated(x, w, (1,), [(pad, pad)],
                                     dimension_numbers=("NCH", "OIH", "NCH"))
        return y + b[None, :, None]

    def gnorm(x, w, b, g):
        bsz, c, t = x.shape
        xg = x.reshape(bsz, g, c // g, t)
        mean = xg.mean(axis=(2, 3), keepdims=True)
        var = ((xg - mean) ** 2).mean(axis=(2, 3), keepdims=True)
        xn = (xg - mean) / jnp.sqrt(var + 1e-5)
        return xn.reshape(bsz, c, t) * w[None, :, None] + b[None, :, None]

    cout = p["conv0_w"].shape[0]
    h = mish(gnorm(conv1d(x, p["conv0_w"], p["conv0_b"], 1),
                   p["gn0_w"], p["gn0_b"], n_groups))
    e = mish(cond) @ p["lin_w"].T + p["lin_b"]
    if cond_predict_scale:
        h = e[:, :cout][:, :, None] * h + e[:, cout:][:, :, None]
    else:
        h = h + e[:, :, None]
    h = mish(gnorm(conv1d(h, p["conv1_w"], p["conv1_b"], 1),
                   p["gn1_w"], p["gn1_b"], n_groups))
    res = conv1d(x, p["res_w"], p["res_b"], 0) if "res_w" in p else x
    return h + res


# ----------------------------------- main -------------------------------------

if __name__ == "__main__":
    def make_params(key, cin, cout, cond_dim, k, cond_predict_scale, with_res):
        cond_channels = cout * 2 if cond_predict_scale else cout
        ks = jax.random.split(key, 12)
        p = {
            "conv0_w": 0.2 * jax.random.normal(ks[0], (cout, cin, k), jnp.float32),
            "conv0_b": 0.1 * jax.random.normal(ks[1], (cout,), jnp.float32),
            "gn0_w": 1.0 + 0.1 * jax.random.normal(ks[2], (cout,), jnp.float32),
            "gn0_b": 0.1 * jax.random.normal(ks[3], (cout,), jnp.float32),
            "conv1_w": 0.2 * jax.random.normal(ks[4], (cout, cout, k), jnp.float32),
            "conv1_b": 0.1 * jax.random.normal(ks[5], (cout,), jnp.float32),
            "gn1_w": 1.0 + 0.1 * jax.random.normal(ks[6], (cout,), jnp.float32),
            "gn1_b": 0.1 * jax.random.normal(ks[7], (cout,), jnp.float32),
            "lin_w": 0.2 * jax.random.normal(ks[8], (cond_channels, cond_dim), jnp.float32),
            "lin_b": 0.1 * jax.random.normal(ks[9], (cond_channels,), jnp.float32),
        }
        if with_res:
            p["res_w"] = 0.2 * jax.random.normal(ks[10], (cout, cin, 1), jnp.float32)
            p["res_b"] = 0.1 * jax.random.normal(ks[11], (cout,), jnp.float32)
        return p

    key = jax.random.PRNGKey(0)
    k_a, k_b, kx_a, kc_a, kx_b, kc_b = jax.random.split(key, 6)

    # Config A: Cin != Cout, cond_predict_scale=True, 1x1 residual conv.
    B, CIN, COUT, T, COND_DIM, G = 8, 8, 16, 16, 32, 8
    params_a = make_params(k_a, CIN, COUT, COND_DIM, 3, True, True)
    x_a = jax.random.normal(kx_a, (B, CIN, T), jnp.float32)
    cond_a = jax.random.normal(kc_a, (B, COND_DIM), jnp.float32)
    ref_a = _ref_forward(x_a, cond_a, params_a, G, True)

    out_bf16 = jax.block_until_ready(conditional_residual_block_1d(
        x_a, cond_a, params_a, n_groups=G, cond_predict_scale=True,
        compute_dtype=jnp.bfloat16))
    np.testing.assert_allclose(np.asarray(out_bf16), np.asarray(ref_a),
                               rtol=5e-2, atol=5e-2)

    out_f32 = jax.block_until_ready(conditional_residual_block_1d(
        x_a, cond_a, params_a, n_groups=G, cond_predict_scale=True,
        compute_dtype=jnp.float32))
    np.testing.assert_allclose(np.asarray(out_f32), np.asarray(ref_a),
                               rtol=2e-4, atol=2e-4)

    # Config B: Cin == Cout (identity residual), additive conditioning.
    B2, C2, T2 = 2, 16, 16
    params_b = make_params(k_b, C2, C2, COND_DIM, 3, False, False)
    x_b = jax.random.normal(kx_b, (B2, C2, T2), jnp.float32)
    cond_b = jax.random.normal(kc_b, (B2, COND_DIM), jnp.float32)
    ref_b = _ref_forward(x_b, cond_b, params_b, G, False)
    out_b = jax.block_until_ready(conditional_residual_block_1d(
        x_b, cond_b, params_b, n_groups=G, cond_predict_scale=False,
        compute_dtype=jnp.float32))
    np.testing.assert_allclose(np.asarray(out_b), np.asarray(ref_b),
                               rtol=2e-4, atol=2e-4)

    print("KERNEL_OK")
</pallas_src>

<mosaic_0001>
module attributes {stable_mosaic.version = 11 : i64} {
  func.func @_cond_res_block_kernel(%arg0: i32, %arg1: memref<1x64x8xf32, #tpu.memory_space<vmem>>, %arg2: memref<1x4x16xf32, #tpu.memory_space<vmem>>, %arg3: memref<1x4x16xf32, #tpu.memory_space<vmem>>, %arg4: memref<24x16xbf16, #tpu.memory_space<vmem>>, %arg5: memref<1x16xf32, #tpu.memory_space<vmem>>, %arg6: memref<1x16xf32, #tpu.memory_space<vmem>>, %arg7: memref<1x16xf32, #tpu.memory_space<vmem>>, %arg8: memref<48x16xbf16, #tpu.memory_space<vmem>>, %arg9: memref<1x16xf32, #tpu.memory_space<vmem>>, %arg10: memref<1x16xf32, #tpu.memory_space<vmem>>, %arg11: memref<1x16xf32, #tpu.memory_space<vmem>>, %arg12: memref<16x8xf32, #tpu.memory_space<vmem>>, %arg13: memref<8x16xf32, #tpu.memory_space<vmem>>, %arg14: memref<64x1xf32, #tpu.memory_space<vmem>>, %arg15: memref<64x1xf32, #tpu.memory_space<vmem>>, %arg16: memref<8x16xbf16, #tpu.memory_space<vmem>>, %arg17: memref<1x16xf32, #tpu.memory_space<vmem>>, %arg18: memref<1x64x16xf32, #tpu.memory_space<vmem>>) attributes {dimension_semantics = [#tpu.dimension_semantics<parallel>], iteration_bounds = array<i64: 2>, scalar_prefetch = 0 : i64, scratch_operands = 0 : i64, tpu.core_type = #tpu.core_type<tc>, window_params = [{transform_indices = @transform_0, window_bounds = array<i64: 1, 64, 8>}, {transform_indices = @transform_1, window_bounds = array<i64: 1, 4, 16>}, {transform_indices = @transform_2, window_bounds = array<i64: 1, 4, 16>}, {pipeline_mode = #tpu.pipeline_mode<synchronous>, transform_indices = @transform_3, window_bounds = array<i64: 24, 16>}, {pipeline_mode = #tpu.pipeline_mode<synchronous>, transform_indices = @transform_4, window_bounds = array<i64: 1, 16>}, {pipeline_mode = #tpu.pipeline_mode<synchronous>, transform_indices = @transform_5, window_bounds = array<i64: 1, 16>}, {pipeline_mode = #tpu.pipeline_mode<synchronous>, transform_indices = @transform_6, window_bounds = array<i64: 1, 16>}, {pipeline_mode = #tpu.pipeline_mode<synchronous>, transform_indices = @transform_7, window_bounds = array<i64: 48, 16>}, {pipeline_mode = #tpu.pipeline_mode<synchronous>, transform_indices = @transform_8, window_bounds = array<i64: 1, 16>}, {pipeline_mode = #tpu.pipeline_mode<synchronous>, transform_indices = @transform_9, window_bounds = array<i64: 1, 16>}, {pipeline_mode = #tpu.pipeline_mode<synchronous>, transform_indices = @transform_10, window_bounds = array<i64: 1, 16>}, {pipeline_mode = #tpu.pipeline_mode<synchronous>, transform_indices = @transform_11, window_bounds = array<i64: 16, 8>}, {pipeline_mode = #tpu.pipeline_mode<synchronous>, transform_indices = @transform_12, window_bounds = array<i64: 8, 16>}, {pipeline_mode = #tpu.pipeline_mode<synchronous>, transform_indices = @transform_13, window_bounds = array<i64: 64, 1>}, {pipeline_mode = #tpu.pipeline_mode<synchronous>, transform_indices = @transform_14, window_bounds = array<i64: 64, 1>}, {pipeline_mode = #tpu.pipeline_mode<synchronous>, transform_indices = @transform_15, window_bounds = array<i64: 8, 16>}, {pipeline_mode = #tpu.pipeline_mode<synchronous>, transform_indices = @transform_16, window_bounds = array<i64: 1, 16>}, {transform_indices = @transform_17, window_bounds = array<i64: 1, 64, 16>}]} {
    %c0 = arith.constant 0 : index
    %c0_0 = arith.constant 0 : index
    %c0_1 = arith.constant 0 : index
    %0 = vector.load %arg1[%c0, %c0_0, %c0_1] : memref<1x64x8xf32, #tpu.memory_space<vmem>>, vector<1x64x8xf32>
    %1 = vector.shape_cast %0 : vector<1x64x8xf32> to vector<64x8xf32>
    %c0_2 = arith.constant 0 : index
    %c0_3 = arith.constant 0 : index
    %2 = vector.load %arg12[%c0_2, %c0_3] : memref<16x8xf32, #tpu.memory_space<vmem>>, vector<16x8xf32>
    %c0_4 = arith.constant 0 : index
    %c0_5 = arith.constant 0 : index
    %3 = vector.load %arg13[%c0_4, %c0_5] : memref<8x16xf32, #tpu.memory_space<vmem>>, vector<8x16xf32>
    %c0_6 = arith.constant 0 : index
    %c0_7 = arith.constant 0 : index
    %4 = vector.load %arg14[%c0_6, %c0_7] : memref<64x1xf32, #tpu.memory_space<vmem>>, vector<64x1xf32>
    %c0_8 = arith.constant 0 : index
    %c0_9 = arith.constant 0 : index
    %5 = vector.load %arg15[%c0_8, %c0_9] : memref<64x1xf32, #tpu.memory_space<vmem>>, vector<64x1xf32>
    %c0_10 = arith.constant 0 : index
    %c0_11 = arith.constant 0 : index
    %6 = vector.load %arg4[%c0_10, %c0_11] : memref<24x16xbf16, #tpu.memory_space<vmem>>, vector<24x16xbf16>
    %c0_12 = arith.constant 0 : index
    %c0_13 = arith.constant 0 : index
    %7 = vector.load %arg5[%c0_12, %c0_13] : memref<1x16xf32, #tpu.memory_space<vmem>>, vector<1x16xf32>
    %c0_14 = arith.constant 0 : index
    %c0_15 = arith.constant 0 : index
    %8 = vector.load %arg6[%c0_14, %c0_15] : memref<1x16xf32, #tpu.memory_space<vmem>>, vector<1x16xf32>
    %c0_16 = arith.constant 0 : index
    %c0_17 = arith.constant 0 : index
    %9 = vector.load %arg7[%c0_16, %c0_17] : memref<1x16xf32, #tpu.memory_space<vmem>>, vector<1x16xf32>
    %c1_i32 = arith.constant 1 : i32
    %10 = tpu.dynamic_rotate %1 by %c1_i32 dim 0 : vector<64x8xf32>, i32 -> vector<64x8xf32>
    %11 = vector.broadcast %4 : vector<64x1xf32> to vector<64x8xf32>
    %12 = arith.mulf %10, %11 : vector<64x8xf32>
    %c63_i32 = arith.constant 63 : i32
    %13 = tpu.dynamic_rotate %1 by %c63_i32 dim 0 : vector<64x8xf32>, i32 -> vector<64x8xf32>
    %14 = vector.broadcast %5 : vector<64x1xf32> to vector<64x8xf32>
    %15 = arith.mulf %13, %14 : vector<64x8xf32>
    %16 = tpu.concatenate %12, %1, %15 in 1 : vector<64x8xf32>, vector<64x8xf32>, vector<64x8xf32> -> vector<64x24xf32>
    %17 = arith.truncf %16 : vector<64x24xf32> to vector<64x24xbf16>
    %cst = arith.constant dense<0.000000e+00> : vector<64x16xf32>
    %18 = tpu.matmul %17, %6, %cst {dimension_numbers = #tpu.dot_dimension_numbers<[1], [0], [0], [1], [0, 0, 1, 1], [], []>} : vector<64x24xbf16>, vector<24x16xbf16>, vector<64x16xf32> -> vector<64x16xf32>
    %19 = vector.broadcast %7 : vector<1x16xf32> to vector<64x16xf32>
    %20 = arith.addf %18, %19 : vector<64x16xf32>
    %21 = vector.shape_cast %20 : vector<64x16xf32> to vector<4x16x16xf32>
    %cst_18 = arith.constant dense<0.000000e+00> : vector<4x16xf32>
    %22 = vector.multi_reduction <add>, %21, %cst_18 [1] : vector<4x16x16xf32> to vector<4x16xf32>
    %23 = arith.mulf %21, %21 : vector<4x16x16xf32>
    %cst_19 = arith.constant dense<0.000000e+00> : vector<4x16xf32>
    %24 = vector.multi_reduction <add>, %23, %cst_19 [1] : vector<4x16x16xf32> to vector<4x16xf32>
    %cst_20 = arith.constant dense<0.000000e+00> : vector<4x8xf32>
    %25 = tpu.matmul %22, %2, %cst_20 {dimension_numbers = #tpu.dot_dimension_numbers<[1], [0], [0], [1], [0, 0, 1, 1], [], []>} : vector<4x16xf32>, vector<16x8xf32>, vector<4x8xf32> -> vector<4x8xf32>
    %cst_21 = arith.constant dense<0.000000e+00> : vector<4x8xf32>
    %26 = tpu.matmul %24, %2, %cst_21 {dimension_numbers = #tpu.dot_dimension_numbers<[1], [0], [0], [1], [0, 0, 1, 1], [], []>} : vector<4x16xf32>, vector<16x8xf32>, vector<4x8xf32> -> vector<4x8xf32>
    %cst_22 = arith.constant 3.125000e-02 : f32
    %27 = vector.broadcast %cst_22 : f32 to vector<4x8xf32>
    %28 = arith.mulf %25, %27 : vector<4x8xf32>
    %cst_23 = arith.constant 3.125000e-02 : f32
    %29 = vector.broadcast %cst_23 : f32 to vector<4x8xf32>
    %30 = arith.mulf %26, %29 : vector<4x8xf32>
    %31 = arith.mulf %28, %28 : vector<4x8xf32>
    %32 = arith.subf %30, %31 : vector<4x8xf32>
    %cst_24 = arith.constant 0.000000e+00 : f32
    %33 = vector.broadcast %cst_24 : f32 to vector<4x8xf32>
    %34 = arith.maximumf %32, %33 : vector<4x8xf32>
    %cst_25 = arith.constant 9.99999974E-6 : f32
    %35 = vector.broadcast %cst_25 : f32 to vector<4x8xf32>
    %36 = arith.addf %34, %35 : vector<4x8xf32>
    %37 = math.rsqrt %36 : vector<4x8xf32>
    %cst_26 = arith.constant dense<0.000000e+00> : vector<4x16xf32>
    %38 = tpu.matmul %28, %3, %cst_26 {dimension_numbers = #tpu.dot_dimension_numbers<[1], [0], [0], [1], [0, 0, 1, 1], [], []>} : vector<4x8xf32>, vector<8x16xf32>, vector<4x16xf32> -> vector<4x16xf32>
    %cst_27 = arith.constant dense<0.000000e+00> : vector<4x16xf32>
    %39 = tpu.matmul %37, %3, %cst_27 {dimension_numbers = #tpu.dot_dimension_numbers<[1], [0], [0], [1], [0, 0, 1, 1], [], []>} : vector<4x8xf32>, vector<8x16xf32>, vector<4x16xf32> -> vector<4x16xf32>
    %40 = vector.broadcast %8 : vector<1x16xf32> to vector<4x16xf32>
    %41 = arith.mulf %39, %40 : vector<4x16xf32>
    %42 = arith.mulf %38, %41 : vector<4x16xf32>
    %43 = vector.broadcast %9 : vector<1x16xf32> to vector<4x16xf32>
    %44 = arith.subf %43, %42 : vector<4x16xf32>
    %45 = vector.shape_cast %41 : vector<4x16xf32> to vector<4x1x16xf32>
    %46 = vector.broadcast %45 : vector<4x1x16xf32> to vector<4x16x16xf32>
    %47 = arith.mulf %21, %46 : vector<4x16x16xf32>
    %48 = vector.shape_cast %44 : vector<4x16xf32> to vector<4x1x16xf32>
    %49 = vector.broadcast %48 : vector<4x1x16xf32> to vector<4x16x16xf32>
    %50 = arith.addf %47, %49 : vector<4x16x16xf32>
    %cst_28 = arith.constant 2.000000e+01 : f32
    %51 = vector.broadcast %cst_28 : f32 to vector<4x16x16xf32>
    %52 = arith.minimumf %50, %51 : vector<4x16x16xf32>
    %53 = math.exp %52 : vector<4x16x16xf32>
    %cst_29 = arith.constant 2.000000e+00 : f32
    %54 = vector.broadcast %cst_29 : f32 to vector<4x16x16xf32>
    %55 = arith.addf %53, %54 : vector<4x16x16xf32>
    %56 = arith.mulf %53, %55 : vector<4x16x16xf32>
    %cst_30 = arith.constant 2.000000e+00 : f32
    %57 = vector.broadcast %cst_30 : f32 to vector<4x16x16xf32>
    %58 = arith.addf %56, %57 : vector<4x16x16xf32>
    %59 = tpu.reciprocal %58 {approx = true} : vector<4x16x16xf32> -> vector<4x16x16xf32>
    %60 = arith.mulf %56, %59 : vector<4x16x16xf32>
    %61 = arith.mulf %50, %60 : vector<4x16x16xf32>
    %62 = vector.shape_cast %61 : vector<4x16x16xf32> to vector<64x16xf32>
    %63 = vector.shape_cast %62 : vector<64x16xf32> to vector<4x16x16xf32>
    %c0_31 = arith.constant 0 : index
    %c0_32 = arith.constant 0 : index
    %c0_33 = arith.constant 0 : index
    %64 = vector.load %arg2[%c0_31, %c0_32, %c0_33] : memref<1x4x16xf32, #tpu.memory_space<vmem>>, vector<1x4x16xf32>
    %65 = vector.shape_cast %64 : vector<1x4x16xf32> to vector<4x16xf32>
    %66 = vector.shape_cast %65 : vector<4x16xf32> to vector<4x1x16xf32>
    %67 = vector.broadcast %66 : vector<4x1x16xf32> to vector<4x16x16xf32>
    %68 = arith.mulf %67, %63 : vector<4x16x16xf32>
    %c0_34 = arith.constant 0 : index
    %c0_35 = arith.constant 0 : index
    %c0_36 = arith.constant 0 : index
    %69 = vector.load %arg3[%c0_34, %c0_35, %c0_36] : memref<1x4x16xf32, #tpu.memory_space<vmem>>, vector<1x4x16xf32>
    %70 = vector.shape_cast %69 : vector<1x4x16xf32> to vector<4x16xf32>
    %71 = vector.shape_cast %70 : vector<4x16xf32> to vector<4x1x16xf32>
    %72 = vector.broadcast %71 : vector<4x1x16xf32> to vector<4x16x16xf32>
    %73 = arith.addf %68, %72 : vector<4x16x16xf32>
    %74 = vector.shape_cast %73 : vector<4x16x16xf32> to vector<64x16xf32>
    %c0_37 = arith.constant 0 : index
    %c0_38 = arith.constant 0 : index
    %75 = vector.load %arg8[%c0_37, %c0_38] : memref<48x16xbf16, #tpu.memory_space<vmem>>, vector<48x16xbf16>
    %c0_39 = arith.constant 0 : index
    %c0_40 = arith.constant 0 : index
    %76 = vector.load %arg9[%c0_39, %c0_40] : memref<1x16xf32, #tpu.memory_space<vmem>>, vector<1x16xf32>
    %c0_41 = arith.constant 0 : index
    %c0_42 = arith.constant 0 : index
    %77 = vector.load %arg10[%c0_41, %c0_42] : memref<1x16xf32, #tpu.memory_space<vmem>>, vector<1x16xf32>
    %c0_43 = arith.constant 0 : index
    %c0_44 = arith.constant 0 : index
    %78 = vector.load %arg11[%c0_43, %c0_44] : memref<1x16xf32, #tpu.memory_space<vmem>>, vector<1x16xf32>
    %c1_i32_45 = arith.constant 1 : i32
    %79 = tpu.dynamic_rotate %74 by %c1_i32_45 dim 0 : vector<64x16xf32>, i32 -> vector<64x16xf32>
    %80 = vector.broadcast %4 : vector<64x1xf32> to vector<64x16xf32>
    %81 = arith.mulf %79, %80 : vector<64x16xf32>
    %c63_i32_46 = arith.constant 63 : i32
    %82 = tpu.dynamic_rotate %74 by %c63_i32_46 dim 0 : vector<64x16xf32>, i32 -> vector<64x16xf32>
    %83 = vector.broadcast %5 : vector<64x1xf32> to vector<64x16xf32>
    %84 = arith.mulf %82, %83 : vector<64x16xf32>
    %85 = tpu.concatenate %81, %74, %84 in 1 : vector<64x16xf32>, vector<64x16xf32>, vector<64x16xf32> -> vector<64x48xf32>
    %86 = arith.truncf %85 : vector<64x48xf32> to vector<64x48xbf16>
    %cst_47 = arith.constant dense<0.000000e+00> : vector<64x16xf32>
    %87 = tpu.matmul %86, %75, %cst_47 {dimension_numbers = #tpu.dot_dimension_numbers<[1], [0], [0], [1], [0, 0, 1, 1], [], []>} : vector<64x48xbf16>, vector<48x16xbf16>, vector<64x16xf32> -> vector<64x16xf32>
    %88 = vector.broadcast %76 : vector<1x16xf32> to vector<64x16xf32>
    %89 = arith.addf %87, %88 : vector<64x16xf32>
    %90 = vector.shape_cast %89 : vector<64x16xf32> to vector<4x16x16xf32>
    %cst_48 = arith.constant dense<0.000000e+00> : vector<4x16xf32>
    %91 = vector.multi_reduction <add>, %90, %cst_48 [1] : vector<4x16x16xf32> to vector<4x16xf32>
    %92 = arith.mulf %90, %90 : vector<4x16x16xf32>
    %cst_49 = arith.constant dense<0.000000e+00> : vector<4x16xf32>
    %93 = vector.multi_reduction <add>, %92, %cst_49 [1] : vector<4x16x16xf32> to vector<4x16xf32>
    %cst_50 = arith.constant dense<0.000000e+00> : vector<4x8xf32>
    %94 = tpu.matmul %91, %2, %cst_50 {dimension_numbers = #tpu.dot_dimension_numbers<[1], [0], [0], [1], [0, 0, 1, 1], [], []>} : vector<4x16xf32>, vector<16x8xf32>, vector<4x8xf32> -> vector<4x8xf32>
    %cst_51 = arith.constant dense<0.000000e+00> : vector<4x8xf32>
    %95 = tpu.matmul %93, %2, %cst_51 {dimension_numbers = #tpu.dot_dimension_numbers<[1], [0], [0], [1], [0, 0, 1, 1], [], []>} : vector<4x16xf32>, vector<16x8xf32>, vector<4x8xf32> -> vector<4x8xf32>
    %cst_52 = arith.constant 3.125000e-02 : f32
    %96 = vector.broadcast %cst_52 : f32 to vector<4x8xf32>
    %97 = arith.mulf %94, %96 : vector<4x8xf32>
    %cst_53 = arith.constant 3.125000e-02 : f32
    %98 = vector.broadcast %cst_53 : f32 to vector<4x8xf32>
    %99 = arith.mulf %95, %98 : vector<4x8xf32>
    %100 = arith.mulf %97, %97 : vector<4x8xf32>
    %101 = arith.subf %99, %100 : vector<4x8xf32>
    %cst_54 = arith.constant 0.000000e+00 : f32
    %102 = vector.broadcast %cst_54 : f32 to vector<4x8xf32>
    %103 = arith.maximumf %101, %102 : vector<4x8xf32>
    %cst_55 = arith.constant 9.99999974E-6 : f32
    %104 = vector.broadcast %cst_55 : f32 to vector<4x8xf32>
    %105 = arith.addf %103, %104 : vector<4x8xf32>
    %106 = math.rsqrt %105 : vector<4x8xf32>
    %cst_56 = arith.constant dense<0.000000e+00> : vector<4x16xf32>
    %107 = tpu.matmul %97, %3, %cst_56 {dimension_numbers = #tpu.dot_dimension_numbers<[1], [0], [0], [1], [0, 0, 1, 1], [], []>} : vector<4x8xf32>, vector<8x16xf32>, vector<4x16xf32> -> vector<4x16xf32>
    %cst_57 = arith.constant dense<0.000000e+00> : vector<4x16xf32>
    %108 = tpu.matmul %106, %3, %cst_57 {dimension_numbers = #tpu.dot_dimension_numbers<[1], [0], [0], [1], [0, 0, 1, 1], [], []>} : vector<4x8xf32>, vector<8x16xf32>, vector<4x16xf32> -> vector<4x16xf32>
    %109 = vector.broadcast %77 : vector<1x16xf32> to vector<4x16xf32>
    %110 = arith.mulf %108, %109 : vector<4x16xf32>
    %111 = arith.mulf %107, %110 : vector<4x16xf32>
    %112 = vector.broadcast %78 : vector<1x16xf32> to vector<4x16xf32>
    %113 = arith.subf %112, %111 : vector<4x16xf32>
    %114 = vector.shape_cast %110 : vector<4x16xf32> to vector<4x1x16xf32>
    %115 = vector.broadcast %114 : vector<4x1x16xf32> to vector<4x16x16xf32>
    %116 = arith.mulf %90, %115 : vector<4x16x16xf32>
    %117 = vector.shape_cast %113 : vector<4x16xf32> to vector<4x1x16xf32>
    %118 = vector.broadcast %117 : vector<4x1x16xf32> to vector<4x16x16xf32>
    %119 = arith.addf %116, %118 : vector<4x16x16xf32>
    %cst_58 = arith.constant 2.000000e+01 : f32
    %120 = vector.broadcast %cst_58 : f32 to vector<4x16x16xf32>
    %121 = arith.minimumf %119, %120 : vector<4x16x16xf32>
    %122 = math.exp %121 : vector<4x16x16xf32>
    %cst_59 = arith.constant 2.000000e+00 : f32
    %123 = vector.broadcast %cst_59 : f32 to vector<4x16x16xf32>
    %124 = arith.addf %122, %123 : vector<4x16x16xf32>
    %125 = arith.mulf %122, %124 : vector<4x16x16xf32>
    %cst_60 = arith.constant 2.000000e+00 : f32
    %126 = vector.broadcast %cst_60 : f32 to vector<4x16x16xf32>
    %127 = arith.addf %125, %126 : vector<4x16x16xf32>
    %128 = tpu.reciprocal %127 {approx = true} : vector<4x16x16xf32> -> vector<4x16x16xf32>
    %129 = arith.mulf %125, %128 : vector<4x16x16xf32>
    %130 = arith.mulf %119, %129 : vector<4x16x16xf32>
    %131 = vector.shape_cast %130 : vector<4x16x16xf32> to vector<64x16xf32>
    %132 = arith.truncf %1 : vector<64x8xf32> to vector<64x8xbf16>
    %c0_61 = arith.constant 0 : index
    %c0_62 = arith.constant 0 : index
    %133 = vector.load %arg16[%c0_61, %c0_62] : memref<8x16xbf16, #tpu.memory_space<vmem>>, vector<8x16xbf16>
    %cst_63 = arith.constant dense<0.000000e+00> : vector<64x16xf32>
    %134 = tpu.matmul %132, %133, %cst_63 {dimension_numbers = #tpu.dot_dimension_numbers<[1], [0], [0], [1], [0, 0, 1, 1], [], []>} : vector<64x8xbf16>, vector<8x16xbf16>, vector<64x16xf32> -> vector<64x16xf32>
    %c0_64 = arith.constant 0 : index
    %c0_65 = arith.constant 0 : index
    %135 = vector.load %arg17[%c0_64, %c0_65] : memref<1x16xf32, #tpu.memory_space<vmem>>, vector<1x16xf32>
    %136 = vector.broadcast %135 : vector<1x16xf32> to vector<64x16xf32>
    %137 = arith.addf %134, %136 : vector<64x16xf32>
    %138 = arith.addf %131, %137 : vector<64x16xf32>
    %c0_66 = arith.constant 0 : index
    %c0_67 = arith.constant 0 : index
    %c0_68 = arith.constant 0 : index
    %139 = vector.load %arg18[%c0_66, %c0_67, %c0_68] : memref<1x64x16xf32, #tpu.memory_space<vmem>>, vector<1x64x16xf32>
    %140 = vector.shape_cast %139 : vector<1x64x16xf32> to vector<64x16xf32>
    %141 = vector.shape_cast %138 : vector<64x16xf32> to vector<1x64x16xf32>
    tpu.vector_store %arg18[%c0_66, %c0_67, %c0_68], %141 {strides = array<i32>} : memref<1x64x16xf32, #tpu.memory_space<vmem>>, vector<1x64x16xf32>,
    return
  }
  func.func @transform_0(%arg0: i32) -> (i32, i32, i32) {
    %c0_i32 = arith.constant 0 : i32
    %c0_i32_0 = arith.constant 0 : i32
    %c0_i32_1 = arith.constant 0 : i32
    return %arg0, %c0_i32, %c0_i32_0 : i32, i32, i32
  }
  func.func @transform_1(%arg0: i32) -> (i32, i32, i32) {
    %c0_i32 = arith.constant 0 : i32
    %c0_i32_0 = arith.constant 0 : i32
    %c0_i32_1 = arith.constant 0 : i32
    return %arg0, %c0_i32, %c0_i32_0 : i32, i32, i32
  }
  func.func @transform_2(%arg0: i32) -> (i32, i32, i32) {
    %c0_i32 = arith.constant 0 : i32
    %c0_i32_0 = arith.constant 0 : i32
    %c0_i32_1 = arith.constant 0 : i32
    return %arg0, %c0_i32, %c0_i32_0 : i32, i32, i32
  }
  func.func @transform_3(%arg0: i32) -> (i32, i32) {
    %c0_i32 = arith.constant 0 : i32
    %c0_i32_0 = arith.constant 0 : i32
    %c0_i32_1 = arith.constant 0 : i32
    return %c0_i32, %c0_i32_0 : i32, i32
  }
  func.func @transform_4(%arg0: i32) -> (i32, i32) {
    %c0_i32 = arith.constant 0 : i32
    %c0_i32_0 = arith.constant 0 : i32
    %c0_i32_1 = arith.constant 0 : i32
    return %c0_i32, %c0_i32_0 : i32, i32
  }
  func.func @transform_5(%arg0: i32) -> (i32, i32) {
    %c0_i32 = arith.constant 0 : i32
    %c0_i32_0 = arith.constant 0 : i32
    %c0_i32_1 = arith.constant 0 : i32
    return %c0_i32, %c0_i32_0 : i32, i32
  }
  func.func @transform_6(%arg0: i32) -> (i32, i32) {
    %c0_i32 = arith.constant 0 : i32
    %c0_i32_0 = arith.constant 0 : i32
    %c0_i32_1 = arith.constant 0 : i32
    return %c0_i32, %c0_i32_0 : i32, i32
  }
  func.func @transform_7(%arg0: i32) -> (i32, i32) {
    %c0_i32 = arith.constant 0 : i32
    %c0_i32_0 = arith.constant 0 : i32
    %c0_i32_1 = arith.constant 0 : i32
    return %c0_i32, %c0_i32_0 : i32, i32
  }
  func.func @transform_8(%arg0: i32) -> (i32, i32) {
    %c0_i32 = arith.constant 0 : i32
    %c0_i32_0 = arith.constant 0 : i32
    %c0_i32_1 = arith.constant 0 : i32
    return %c0_i32, %c0_i32_0 : i32, i32
  }
  func.func @transform_9(%arg0: i32) -> (i32, i32) {
    %c0_i32 = arith.constant 0 : i32
    %c0_i32_0 = arith.constant 0 : i32
    %c0_i32_1 = arith.constant 0 : i32
    return %c0_i32, %c0_i32_0 : i32, i32
  }
  func.func @transform_10(%arg0: i32) -> (i32, i32) {
    %c0_i32 = arith.constant 0 : i32
    %c0_i32_0 = arith.constant 0 : i32
    %c0_i32_1 = arith.constant 0 : i32
    return %c0_i32, %c0_i32_0 : i32, i32
  }
  func.func @transform_11(%arg0: i32) -> (i32, i32) {
    %c0_i32 = arith.constant 0 : i32
    %c0_i32_0 = arith.constant 0 : i32
    %c0_i32_1 = arith.constant 0 : i32
    return %c0_i32, %c0_i32_0 : i32, i32
  }
  func.func @transform_12(%arg0: i32) -> (i32, i32) {
    %c0_i32 = arith.constant 0 : i32
    %c0_i32_0 = arith.constant 0 : i32
    %c0_i32_1 = arith.constant 0 : i32
    return %c0_i32, %c0_i32_0 : i32, i32
  }
  func.func @transform_13(%arg0: i32) -> (i32, i32) {
    %c0_i32 = arith.constant 0 : i32
    %c0_i32_0 = arith.constant 0 : i32
    %c0_i32_1 = arith.constant 0 : i32
    return %c0_i32, %c0_i32_0 : i32, i32
  }
  func.func @transform_14(%arg0: i32) -> (i32, i32) {
    %c0_i32 = arith.constant 0 : i32
    %c0_i32_0 = arith.constant 0 : i32
    %c0_i32_1 = arith.constant 0 : i32
    return %c0_i32, %c0_i32_0 : i32, i32
  }
  func.func @transform_15(%arg0: i32) -> (i32, i32) {
    %c0_i32 = arith.constant 0 : i32
    %c0_i32_0 = arith.constant 0 : i32
    %c0_i32_1 = arith.constant 0 : i32
    return %c0_i32, %c0_i32_0 : i32, i32
  }
  func.func @transform_16(%arg0: i32) -> (i32, i32) {
    %c0_i32 = arith.constant 0 : i32
    %c0_i32_0 = arith.constant 0 : i32
    %c0_i32_1 = arith.constant 0 : i32
    return %c0_i32, %c0_i32_0 : i32, i32
  }
  func.func @transform_17(%arg0: i32) -> (i32, i32, i32) {
    %c0_i32 = arith.constant 0 : i32
    %c0_i32_0 = arith.constant 0 : i32
    %c0_i32_1 = arith.constant 0 : i32
    return %arg0, %c0_i32, %c0_i32_0 : i32, i32, i32
  }
}

</mosaic_0001>

<llo_original>
// kernel: tpu_custom_call.1
$region0: #{tpu_custom_call.1}
  #allocation0 [shape = 'u32[]', space=smem, size = 0x4, offset = 0x4, fixed_abs, tag = 'smem constant byte address 0x4 - core index']
  #allocation1 [shape = 'u32[72,128]{1,0:T(1,128)}', space=vmem, size = 0x9000, scoped, tag = 'internal scratch']
  %s0 = inlined_call_operand.vmem [shape: f32[2,64,8], index: 0, kind: input, shape index: {}]
  %s1 = inlined_call_operand.vmem [shape: f32[2,4,16], index: 1, kind: input, shape index: {}]
  %s2 = inlined_call_operand.vmem [shape: f32[2,4,16], index: 2, kind: input, shape index: {}]
  %s3 = inlined_call_operand.vmem [shape: bf16[24,16], index: 3, kind: input, shape index: {}]
  %s4 = inlined_call_operand.vmem [shape: f32[1,16], index: 4, kind: input, shape index: {}]
  %s5 = inlined_call_operand.vmem [shape: f32[1,16], index: 5, kind: input, shape index: {}]
  %s6 = inlined_call_operand.vmem [shape: f32[1,16], index: 6, kind: input, shape index: {}]
  %s7 = inlined_call_operand.vmem [shape: bf16[48,16], index: 7, kind: input, shape index: {}]
  %s8 = inlined_call_operand.vmem [shape: f32[1,16], index: 8, kind: input, shape index: {}]
  %s9 = inlined_call_operand.vmem [shape: f32[1,16], index: 9, kind: input, shape index: {}]
  %s10 = inlined_call_operand.vmem [shape: f32[1,16], index: 10, kind: input, shape index: {}]
  %s11 = inlined_call_operand.vmem [shape: f32[16,8], index: 11, kind: input, shape index: {}]
  %s12 = inlined_call_operand.vmem [shape: f32[8,16], index: 12, kind: input, shape index: {}]
  %s13 = inlined_call_operand.vmem [shape: f32[64,1], index: 13, kind: input, shape index: {}]
  %s14 = inlined_call_operand.vmem [shape: f32[64,1], index: 14, kind: input, shape index: {}]
  %s15 = inlined_call_operand.vmem [shape: bf16[8,16], index: 15, kind: input, shape index: {}]
  %s16 = inlined_call_operand.vmem [shape: f32[1,16], index: 16, kind: input, shape index: {}]
  %s17 = inlined_call_operand.vmem [shape: f32[2,64,16], index: 17, kind: output, shape index: {}]
  %s18 = sld [smem:[#allocation0]]
  $region101: #{tpu_custom_call.1} parent=0
    _
  %s20 = ssub.s32 1, %s18
  %s21 = scalar_select 0, %s20, %s18
  loop: start=0, step=1, limit=4
  $region2: #{tpu_custom_call.1} parent=0 // loop_pre_header
    _
  $region3: #{tpu_custom_call.1} parent=0 // loop_header
    %s23 = sphi 0, %s27
    %p24 = scmp.ge.s32.totalorder %s23, 4
    %s33 = sphi 0, %s35
    %s36 = sphi 0, %s33
    %s37 = sphi 0, %s36
    %s53 = sphi 0, %s37
    %s59 = sphi 0, %s61
    %s62 = sphi 0, %s59
    %s63 = sphi 0, %s62
    %s79 = sphi 0, %s63
    %s85 = sphi 0, %s87
    %s88 = sphi 0, %s85
    %s89 = sphi 0, %s88
    %s105 = sphi 0, %s89
    %s109 = sphi 0, %s109
    %s111 = sphi 0, %s109
    %s112 = sphi 0, %s111
    %s126 = sphi 0, %s112
    %s130 = sphi 0, %s130
    %s132 = sphi 0, %s130
    %s133 = sphi 0, %s132
    %s147 = sphi 0, %s133
    %s151 = sphi 0, %s151
    %s153 = sphi 0, %s151
    %s154 = sphi 0, %s153
    %s168 = sphi 0, %s154
    %s172 = sphi 0, %s172
    %s174 = sphi 0, %s172
    %s175 = sphi 0, %s174
    %s189 = sphi 0, %s175
    %s193 = sphi 0, %s193
    %s195 = sphi 0, %s193
    %s196 = sphi 0, %s195
    %s210 = sphi 0, %s196
    %s214 = sphi 0, %s214
    %s216 = sphi 0, %s214
    %s217 = sphi 0, %s216
    %s231 = sphi 0, %s217
    %s235 = sphi 0, %s235
    %s237 = sphi 0, %s235
    %s238 = sphi 0, %s237
    %s252 = sphi 0, %s238
    %s256 = sphi 0, %s256
    %s258 = sphi 0, %s256
    %s259 = sphi 0, %s258
    %s273 = sphi 0, %s259
    %s277 = sphi 0, %s277
    %s279 = sphi 0, %s277
    %s280 = sphi 0, %s279
    %s294 = sphi 0, %s280
    %s298 = sphi 0, %s298
    %s300 = sphi 0, %s298
    %s301 = sphi 0, %s300
    %s315 = sphi 0, %s301
    %s319 = sphi 0, %s319
    %s321 = sphi 0, %s319
    %s322 = sphi 0, %s321
    %s336 = sphi 0, %s322
    %s340 = sphi 0, %s340
    %s342 = sphi 0, %s340
    %s343 = sphi 0, %s342
    %s357 = sphi 0, %s343
    %s361 = sphi 0, %s361
    %s363 = sphi 0, %s361
    %s364 = sphi 0, %s363
    %s378 = sphi 0, %s364
    %s382 = sphi 0, %s382
    %s384 = sphi 0, %s382
    %s385 = sphi 0, %s384
    %s399 = sphi 0, %s385
    %s405 = sphi 0, %s407
    %s408 = sphi 0, %s405
    %s409 = sphi 0, %s408
    %s425 = sphi 0, %s409
  $region4: #{tpu_custom_call.1} parent=0 // loop_header_branch
    %26 = sbr.rel (%p24) target = $region8
  $region5: #{tpu_custom_call.1} parent=0 // loop_body
    %s28 = ssub.s32 %s23, 1
    %s29 = ssub.s32 %s23, 2
    %s30 = sadd.s32 %s23, 1
    %s31 = ssub.s32 %s23, %s30
    %p32 = scmp.eq.s32.totalorder %s31, 0
    %s34 = sadd.s32 %s33, 1
    %s35 = scalar_select %p32, %s33, %s34
    %p38 = pneg %p32
    %p39 = scmp.eq.s32.totalorder %s23, 1
    %p40 = por %p38, %p39
    %p41 = scmp.ne.s32.totalorder %s33, %s36
    %p42 = scmp.eq.s32.totalorder %s23, 0
    %p43 = por %p41, %p42
    %p44 = scmp.ne.s32.totalorder %s33, %s36
    %p45 = scmp.eq.s32.totalorder %s28, 1
    %p46 = por %p44, %p45
    %p47 = scmp.ne.s32.totalorder %s36, %s37
    %p48 = scmp.eq.s32.totalorder %s28, 0
    %p49 = por %p47, %p48
    %p50 = scmp.ne.s32.totalorder %s36, %s37
    %p51 = scmp.eq.s32.totalorder %s29, 1
    %p52 = por %p50, %p51
    %p54 = scmp.ne.s32.totalorder %s37, %s53
    %p55 = scmp.eq.s32.totalorder %s29, 0
    %p56 = por %p54, %p55
    %s57 = ssub.s32 %s23, %s30
    %p58 = scmp.eq.s32.totalorder %s57, 0
    %s60 = sadd.s32 %s59, 1
    %s61 = scalar_select %p58, %s59, %s60
    %p64 = pneg %p58
    %p65 = scmp.eq.s32.totalorder %s23, 1
    %p66 = por %p64, %p65
    %p67 = scmp.ne.s32.totalorder %s59, %s62
    %p68 = scmp.eq.s32.totalorder %s23, 0
    %p69 = por %p67, %p68
    %p70 = scmp.ne.s32.totalorder %s59, %s62
    %p71 = scmp.eq.s32.totalorder %s28, 1
    %p72 = por %p70, %p71
    %p73 = scmp.ne.s32.totalorder %s62, %s63
    %p74 = scmp.eq.s32.totalorder %s28, 0
    %p75 = por %p73, %p74
    %p76 = scmp.ne.s32.totalorder %s62, %s63
    %p77 = scmp.eq.s32.totalorder %s29, 1
    %p78 = por %p76, %p77
    %p80 = scmp.ne.s32.totalorder %s63, %s79
    %p81 = scmp.eq.s32.totalorder %s29, 0
    %p82 = por %p80, %p81
    %s83 = ssub.s32 %s23, %s30
    %p84 = scmp.eq.s32.totalorder %s83, 0
    %s86 = sadd.s32 %s85, 1
    %s87 = scalar_select %p84, %s85, %s86
    %p90 = pneg %p84
    %p91 = scmp.eq.s32.totalorder %s23, 1
    %p92 = por %p90, %p91
    %p93 = scmp.ne.s32.totalorder %s85, %s88
    %p94 = scmp.eq.s32.totalorder %s23, 0
    %p95 = por %p93, %p94
    %p96 = scmp.ne.s32.totalorder %s85, %s88
    %p97 = scmp.eq.s32.totalorder %s28, 1
    %p98 = por %p96, %p97
    %p99 = scmp.ne.s32.totalorder %s88, %s89
    %p100 = scmp.eq.s32.totalorder %s28, 0
    %p101 = por %p99, %p100
    %p102 = scmp.ne.s32.totalorder %s88, %s89
    %p103 = scmp.eq.s32.totalorder %s29, 1
    %p104 = por %p102, %p103
    %p106 = scmp.ne.s32.totalorder %s89, %s105
    %p107 = scmp.eq.s32.totalorder %s29, 0
    %p108 = por %p106, %p107
    %s110 = sadd.s32 %s109, 1
    %p113 = scmp.eq.s32.totalorder %s23, 1
    %p114 = scmp.ne.s32.totalorder %s109, %s111
    %p115 = scmp.eq.s32.totalorder %s23, 0
    %p116 = por %p114, %p115
    %p117 = scmp.ne.s32.totalorder %s109, %s111
    %p118 = scmp.eq.s32.totalorder %s28, 1
    %p119 = por %p117, %p118
    %p120 = scmp.ne.s32.totalorder %s111, %s112
    %p121 = scmp.eq.s32.totalorder %s28, 0
    %p122 = por %p120, %p121
    %p123 = scmp.ne.s32.totalorder %s111, %s112
    %p124 = scmp.eq.s32.totalorder %s29, 1
    %p125 = por %p123, %p124
    %p127 = scmp.ne.s32.totalorder %s112, %s126
    %p128 = scmp.eq.s32.totalorder %s29, 0
    %p129 = por %p127, %p128
    %s131 = sadd.s32 %s130, 1
    %p134 = scmp.eq.s32.totalorder %s23, 1
    %p135 = scmp.ne.s32.totalorder %s130, %s132
    %p136 = scmp.eq.s32.totalorder %s23, 0
    %p137 = por %p135, %p136
    %p138 = scmp.ne.s32.totalorder %s130, %s132
    %p139 = scmp.eq.s32.totalorder %s28, 1
    %p140 = por %p138, %p139
    %p141 = scmp.ne.s32.totalorder %s132, %s133
    %p142 = scmp.eq.s32.totalorder %s28, 0
    %p143 = por %p141, %p142
    %p144 = scmp.ne.s32.totalorder %s132, %s133
    %p145 = scmp.eq.s32.totalorder %s29, 1
    %p146 = por %p144, %p145
    %p148 = scmp.ne.s32.totalorder %s133, %s147
    %p149 = scmp.eq.s32.totalorder %s29, 0
    %p150 = por %p148, %p149
    %s152 = sadd.s32 %s151, 1
    %p155 = scmp.eq.s32.totalorder %s23, 1
    %p156 = scmp.ne.s32.totalorder %s151, %s153
    %p157 = scmp.eq.s32.totalorder %s23, 0
    %p158 = por %p156, %p157
    %p159 = scmp.ne.s32.totalorder %s151, %s153
    %p160 = scmp.eq.s32.totalorder %s28, 1
    %p161 = por %p159, %p160
    %p162 = scmp.ne.s32.totalorder %s153, %s154
    %p163 = scmp.eq.s32.totalorder %s28, 0
    %p164 = por %p162, %p163
    %p165 = scmp.ne.s32.totalorder %s153, %s154
    %p166 = scmp.eq.s32.totalorder %s29, 1
    %p167 = por %p165, %p166
    %p169 = scmp.ne.s32.totalorder %s154, %s168
    %p170 = scmp.eq.s32.totalorder %s29, 0
    %p171 = por %p169, %p170
    %s173 = sadd.s32 %s172, 1
    %p176 = scmp.eq.s32.totalorder %s23, 1
    %p177 = scmp.ne.s32.totalorder %s172, %s174
    %p178 = scmp.eq.s32.totalorder %s23, 0
    %p179 = por %p177, %p178
    %p180 = scmp.ne.s32.totalorder %s172, %s174
    %p181 = scmp.eq.s32.totalorder %s28, 1
    %p182 = por %p180, %p181
    %p183 = scmp.ne.s32.totalorder %s174, %s175
    %p184 = scmp.eq.s32.totalorder %s28, 0
    %p185 = por %p183, %p184
    %p186 = scmp.ne.s32.totalorder %s174, %s175
    %p187 = scmp.eq.s32.totalorder %s29, 1
    %p188 = por %p186, %p187
    %p190 = scmp.ne.s32.totalorder %s175, %s189
    %p191 = scmp.eq.s32.totalorder %s29, 0
    %p192 = por %p190, %p191
    %s194 = sadd.s32 %s193, 1
    %p197 = scmp.eq.s32.totalorder %s23, 1
    %p198 = scmp.ne.s32.totalorder %s193, %s195
    %p199 = scmp.eq.s32.totalorder %s23, 0
    %p200 = por %p198, %p199
    %p201 = scmp.ne.s32.totalorder %s193, %s195
    %p202 = scmp.eq.s32.totalorder %s28, 1
    %p203 = por %p201, %p202
    %p204 = scmp.ne.s32.totalorder %s195, %s196
    %p205 = scmp.eq.s32.totalorder %s28, 0
    %p206 = por %p204, %p205
    %p207 = scmp.ne.s32.totalorder %s195, %s196
    %p208 = scmp.eq.s32.totalorder %s29, 1
    %p209 = por %p207, %p208
    %p211 = scmp.ne.s32.totalorder %s196, %s210
    %p212 = scmp.eq.s32.totalorder %s29, 0
    %p213 = por %p211, %p212
    %s215 = sadd.s32 %s214, 1
    %p218 = scmp.eq.s32.totalorder %s23, 1
    %p219 = scmp.ne.s32.totalorder %s214, %s216
    %p220 = scmp.eq.s32.totalorder %s23, 0
    %p221 = por %p219, %p220
    %p222 = scmp.ne.s32.totalorder %s214, %s216
    %p223 = scmp.eq.s32.totalorder %s28, 1
    %p224 = por %p222, %p223
    %p225 = scmp.ne.s32.totalorder %s216, %s217
    %p226 = scmp.eq.s32.totalorder %s28, 0
    %p227 = por %p225, %p226
    %p228 = scmp.ne.s32.totalorder %s216, %s217
    %p229 = scmp.eq.s32.totalorder %s29, 1
    %p230 = por %p228, %p229
    %p232 = scmp.ne.s32.totalorder %s217, %s231
    %p233 = scmp.eq.s32.totalorder %s29, 0
    %p234 = por %p232, %p233
    %s236 = sadd.s32 %s235, 1
    %p239 = scmp.eq.s32.totalorder %s23, 1
    %p240 = scmp.ne.s32.totalorder %s235, %s237
    %p241 = scmp.eq.s32.totalorder %s23, 0
    %p242 = por %p240, %p241
    %p243 = scmp.ne.s32.totalorder %s235, %s237
    %p244 = scmp.eq.s32.totalorder %s28, 1
    %p245 = por %p243, %p244
    %p246 = scmp.ne.s32.totalorder %s237, %s238
    %p247 = scmp.eq.s32.totalorder %s28, 0
    %p248 = por %p246, %p247
    %p249 = scmp.ne.s32.totalorder %s237, %s238
    %p250 = scmp.eq.s32.totalorder %s29, 1
    %p251 = por %p249, %p250
    %p253 = scmp.ne.s32.totalorder %s238, %s252
    %p254 = scmp.eq.s32.totalorder %s29, 0
    %p255 = por %p253, %p254
    %s257 = sadd.s32 %s256, 1
    %p260 = scmp.eq.s32.totalorder %s23, 1
    %p261 = scmp.ne.s32.totalorder %s256, %s258
    %p262 = scmp.eq.s32.totalorder %s23, 0
    %p263 = por %p261, %p262
    %p264 = scmp.ne.s32.totalorder %s256, %s258
    %p265 = scmp.eq.s32.totalorder %s28, 1
    %p266 = por %p264, %p265
    %p267 = scmp.ne.s32.totalorder %s258, %s259
    %p268 = scmp.eq.s32.totalorder %s28, 0
    %p269 = por %p267, %p268
    %p270 = scmp.ne.s32.totalorder %s258, %s259
    %p271 = scmp.eq.s32.totalorder %s29, 1
    %p272 = por %p270, %p271
    %p274 = scmp.ne.s32.totalorder %s259, %s273
    %p275 = scmp.eq.s32.totalorder %s29, 0
    %p276 = por %p274, %p275
    %s278 = sadd.s32 %s277, 1
    %p281 = scmp.eq.s32.totalorder %s23, 1
    %p282 = scmp.ne.s32.totalorder %s277, %s279
    %p283 = scmp.eq.s32.totalorder %s23, 0
    %p284 = por %p282, %p283
    %p285 = scmp.ne.s32.totalorder %s277, %s279
    %p286 = scmp.eq.s32.totalorder %s28, 1
    %p287 = por %p285, %p286
    %p288 = scmp.ne.s32.totalorder %s279, %s280
    %p289 = scmp.eq.s32.totalorder %s28, 0
    %p290 = por %p288, %p289
    %p291 = scmp.ne.s32.totalorder %s279, %s280
    %p292 = scmp.eq.s32.totalorder %s29, 1
    %p293 = por %p291, %p292
    %p295 = scmp.ne.s32.totalorder %s280, %s294
    %p296 = scmp.eq.s32.totalorder %s29, 0
    %p297 = por %p295, %p296
    %s299 = sadd.s32 %s298, 1
    %p302 = scmp.eq.s32.totalorder %s23, 1
    %p303 = scmp.ne.s32.totalorder %s298, %s300
    %p304 = scmp.eq.s32.totalorder %s23, 0
    %p305 = por %p303, %p304
    %p306 = scmp.ne.s32.totalorder %s298, %s300
    %p307 = scmp.eq.s32.totalorder %s28, 1
    %p308 = por %p306, %p307
    %p309 = scmp.ne.s32.totalorder %s300, %s301
    %p310 = scmp.eq.s32.totalorder %s28, 0
    %p311 = por %p309, %p310
    %p312 = scmp.ne.s32.totalorder %s300, %s301
    %p313 = scmp.eq.s32.totalorder %s29, 1
    %p314 = por %p312, %p313
    %p316 = scmp.ne.s32.totalorder %s301, %s315
    %p317 = scmp.eq.s32.totalorder %s29, 0
    %p318 = por %p316, %p317
    %s320 = sadd.s32 %s319, 1
    %p323 = scmp.eq.s32.totalorder %s23, 1
    %p324 = scmp.ne.s32.totalorder %s319, %s321
    %p325 = scmp.eq.s32.totalorder %s23, 0
    %p326 = por %p324, %p325
    %p327 = scmp.ne.s32.totalorder %s319, %s321
    %p328 = scmp.eq.s32.totalorder %s28, 1
    %p329 = por %p327, %p328
    %p330 = scmp.ne.s32.totalorder %s321, %s322
    %p331 = scmp.eq.s32.totalorder %s28, 0
    %p332 = por %p330, %p331
    %p333 = scmp.ne.s32.totalorder %s321, %s322
    %p334 = scmp.eq.s32.totalorder %s29, 1
    %p335 = por %p333, %p334
    %p337 = scmp.ne.s32.totalorder %s322, %s336
    %p338 = scmp.eq.s32.totalorder %s29, 0
    %p339 = por %p337, %p338
    %s341 = sadd.s32 %s340, 1
    %p344 = scmp.eq.s32.totalorder %s23, 1
    %p345 = scmp.ne.s32.totalorder %s340, %s342
    %p346 = scmp.eq.s32.totalorder %s23, 0
    %p347 = por %p345, %p346
    %p348 = scmp.ne.s32.totalorder %s340, %s342
    %p349 = scmp.eq.s32.totalorder %s28, 1
    %p350 = por %p348, %p349
    %p351 = scmp.ne.s32.totalorder %s342, %s343
    %p352 = scmp.eq.s32.totalorder %s28, 0
    %p353 = por %p351, %p352
    %p354 = scmp.ne.s32.totalorder %s342, %s343
    %p355 = scmp.eq.s32.totalorder %s29, 1
    %p356 = por %p354, %p355
    %p358 = scmp.ne.s32.totalorder %s343, %s357
    %p359 = scmp.eq.s32.totalorder %s29, 0
    %p360 = por %p358, %p359
    %s362 = sadd.s32 %s361, 1
    %p365 = scmp.eq.s32.totalorder %s23, 1
    %p366 = scmp.ne.s32.totalorder %s361, %s363
    %p367 = scmp.eq.s32.totalorder %s23, 0
    %p368 = por %p366, %p367
    %p369 = scmp.ne.s32.totalorder %s361, %s363
    %p370 = scmp.eq.s32.totalorder %s28, 1
    %p371 = por %p369, %p370
    %p372 = scmp.ne.s32.totalorder %s363, %s364
    %p373 = scmp.eq.s32.totalorder %s28, 0
    %p374 = por %p372, %p373
    %p375 = scmp.ne.s32.totalorder %s363, %s364
    %p376 = scmp.eq.s32.totalorder %s29, 1
    %p377 = por %p375, %p376
    %p379 = scmp.ne.s32.totalorder %s364, %s378
    %p380 = scmp.eq.s32.totalorder %s29, 0
    %p381 = por %p379, %p380
    %s383 = sadd.s32 %s382, 1
    %p386 = scmp.eq.s32.totalorder %s23, 1
    %p387 = scmp.ne.s32.totalorder %s382, %s384
    %p388 = scmp.eq.s32.totalorder %s23, 0
    %p389 = por %p387, %p388
    %p390 = scmp.ne.s32.totalorder %s382, %s384
    %p391 = scmp.eq.s32.totalorder %s28, 1
    %p392 = por %p390, %p391
    %p393 = scmp.ne.s32.totalorder %s384, %s385
    %p394 = scmp.eq.s32.totalorder %s28, 0
    %p395 = por %p393, %p394
    %p396 = scmp.ne.s32.totalorder %s384, %s385
    %p397 = scmp.eq.s32.totalorder %s29, 1
    %p398 = por %p396, %p397
    %p400 = scmp.ne.s32.totalorder %s385, %s399
    %p401 = scmp.eq.s32.totalorder %s29, 0
    %p402 = por %p400, %p401
    %s403 = ssub.s32 %s23, %s30
    %p404 = scmp.eq.s32.totalorder %s403, 0
    %s406 = sadd.s32 %s405, 1
    %s407 = scalar_select %p404, %s405, %s406
    %p410 = pneg %p404
    %p411 = scmp.eq.s32.totalorder %s23, 1
    %p412 = por %p410, %p411
    %p413 = scmp.ne.s32.totalorder %s405, %s408
    %p414 = scmp.eq.s32.totalorder %s23, 0
    %p415 = por %p413, %p414
    %p416 = scmp.ne.s32.totalorder %s405, %s408
    %p417 = scmp.eq.s32.totalorder %s28, 1
    %p418 = por %p416, %p417
    %p419 = scmp.ne.s32.totalorder %s408, %s409
    %p420 = scmp.eq.s32.totalorder %s28, 0
    %p421 = por %p419, %p420
    %p422 = scmp.ne.s32.totalorder %s408, %s409
    %p423 = scmp.eq.s32.totalorder %s29, 1
    %p424 = por %p422, %p423
    %p426 = scmp.ne.s32.totalorder %s409, %s425
    %p427 = scmp.eq.s32.totalorder %s29, 0
    %p428 = por %p426, %p427
    %p429 = scmp.le.s32.totalorder 1, %s23
    %p430 = scmp.lt.s32.totalorder %s23, 3
    %p431 = pnand %p429, %p430
    %p432 = pneg %p431
    // Predicated region
    $region9: #{tpu_custom_call.1} parent=5 // pred_check
      _
    $region10: #{tpu_custom_call.1} parent=5 // pred_check_branch
      %434 = sbr.rel (%p431) target = $region12
    $region11: #{tpu_custom_call.1} parent=5 // pred_region
      %s435 = ssub.s32 %s23, 1
      // Predicated region
      $region13: #{tpu_custom_call.1} parent=11 // pred_check
        %p436 = pneg %p122
      $region14: #{tpu_custom_call.1} parent=11 // pred_check_branch
        %438 = sbr.rel (%p436) target = $region16
      $region15: #{tpu_custom_call.1} parent=11 // pred_region
        _
      $region16: #{tpu_custom_call.1} parent=11 // pred_fallthru
        _
      // Predicated region
      $region17: #{tpu_custom_call.1} parent=11 // pred_check
        %p439 = pneg %p143
      $region18: #{tpu_custom_call.1} parent=11 // pred_check_branch
        %441 = sbr.rel (%p439) target = $region20
      $region19: #{tpu_custom_call.1} parent=11 // pred_region
        _
      $region20: #{tpu_custom_call.1} parent=11 // pred_fallthru
        _
      // Predicated region
      $region21: #{tpu_custom_call.1} parent=11 // pred_check
        %p442 = pneg %p164
      $region22: #{tpu_custom_call.1} parent=11 // pred_check_branch
        %444 = sbr.rel (%p442) target = $region24
      $region23: #{tpu_custom_call.1} parent=11 // pred_region
        _
      $region24: #{tpu_custom_call.1} parent=11 // pred_fallthru
        _
      // Predicated region
      $region25: #{tpu_custom_call.1} parent=11 // pred_check
        %p445 = pneg %p185
      $region26: #{tpu_custom_call.1} parent=11 // pred_check_branch
        %447 = sbr.rel (%p445) target = $region28
      $region27: #{tpu_custom_call.1} parent=11 // pred_region
        _
      $region28: #{tpu_custom_call.1} parent=11 // pred_fallthru
        _
      // Predicated region
      $region29: #{tpu_custom_call.1} parent=11 // pred_check
        %p448 = pneg %p206
      $region30: #{tpu_custom_call.1} parent=11 // pred_check_branch
        %450 = sbr.rel (%p448) target = $region32
      $region31: #{tpu_custom_call.1} parent=11 // pred_region
        _
      $region32: #{tpu_custom_call.1} parent=11 // pred_fallthru
        _
      // Predicated region
      $region33: #{tpu_custom_call.1} parent=11 // pred_check
        %p451 = pneg %p227
      $region34: #{tpu_custom_call.1} parent=11 // pred_check_branch
        %453 = sbr.rel (%p451) target = $region36
      $region35: #{tpu_custom_call.1} parent=11 // pred_region
        _
      $region36: #{tpu_custom_call.1} parent=11 // pred_fallthru
        _
      // Predicated region
      $region37: #{tpu_custom_call.1} parent=11 // pred_check
        %p454 = pneg %p248
      $region38: #{tpu_custom_call.1} parent=11 // pred_check_branch
        %456 = sbr.rel (%p454) target = $region40
      $region39: #{tpu_custom_call.1} parent=11 // pred_region
        _
      $region40: #{tpu_custom_call.1} parent=11 // pred_fallthru
        _
      // Predicated region
      $region41: #{tpu_custom_call.1} parent=11 // pred_check
        %p457 = pneg %p269
      $region42: #{tpu_custom_call.1} parent=11 // pred_check_branch
        %459 = sbr.rel (%p457) target = $region44
      $region43: #{tpu_custom_call.1} parent=11 // pred_region
        _
      $region44: #{tpu_custom_call.1} parent=11 // pred_fallthru
        _
      // Predicated region
      $region45: #{tpu_custom_call.1} parent=11 // pred_check
        %p460 = pneg %p290
      $region46: #{tpu_custom_call.1} parent=11 // pred_check_branch
        %462 = sbr.rel (%p460) target = $region48
      $region47: #{tpu_custom_call.1} parent=11 // pred_region
        _
      $region48: #{tpu_custom_call.1} parent=11 // pred_fallthru
        _
      // Predicated region
      $region49: #{tpu_custom_call.1} parent=11 // pred_check
        %p463 = pneg %p311
      $region50: #{tpu_custom_call.1} parent=11 // pred_check_branch
        %465 = sbr.rel (%p463) target = $region52
      $region51: #{tpu_custom_call.1} parent=11 // pred_region
        _
      $region52: #{tpu_custom_call.1} parent=11 // pred_fallthru
        _
      // Predicated region
      $region53: #{tpu_custom_call.1} parent=11 // pred_check
        %p466 = pneg %p332
      $region54: #{tpu_custom_call.1} parent=11 // pred_check_branch
        %468 = sbr.rel (%p466) target = $region56
      $region55: #{tpu_custom_call.1} parent=11 // pred_region
        _
      $region56: #{tpu_custom_call.1} parent=11 // pred_fallthru
        _
      // Predicated region
      $region57: #{tpu_custom_call.1} parent=11 // pred_check
        %p469 = pneg %p353
      $region58: #{tpu_custom_call.1} parent=11 // pred_check_branch
        %471 = sbr.rel (%p469) target = $region60
      $region59: #{tpu_custom_call.1} parent=11 // pred_region
        _
      $region60: #{tpu_custom_call.1} parent=11 // pred_fallthru
        _
      // Predicated region
      $region61: #{tpu_custom_call.1} parent=11 // pred_check
        %p472 = pneg %p374
      $region62: #{tpu_custom_call.1} parent=11 // pred_check_branch
        %474 = sbr.rel (%p472) target = $region64
      $region63: #{tpu_custom_call.1} parent=11 // pred_region
        _
      $region64: #{tpu_custom_call.1} parent=11 // pred_fallthru
        _
      // Predicated region
      $region65: #{tpu_custom_call.1} parent=11 // pred_check
        %p475 = pneg %p395
      $region66: #{tpu_custom_call.1} parent=11 // pred_check_branch
        %477 = sbr.rel (%p475) target = $region68
      $region67: #{tpu_custom_call.1} parent=11 // pred_region
        _
      $region68: #{tpu_custom_call.1} parent=11 // pred_fallthru
        _
    $region12: #{tpu_custom_call.1} parent=5 // pred_fallthru
      _
    %p478 = scmp.lt.s32.totalorder %s23, 2
    // Predicated region
    $region69: #{tpu_custom_call.1} parent=5 // pred_check
      %p479 = pneg %p478
    $region70: #{tpu_custom_call.1} parent=5 // pred_check_branch
      %481 = sbr.rel (%p479) target = $region72
    $region71: #{tpu_custom_call.1} parent=5 // pred_region
      // Predicated region
      $region73: #{tpu_custom_call.1} parent=71 // pred_check
        %p482 = pneg %p43
      $region74: #{tpu_custom_call.1} parent=71 // pred_check_branch
        %484 = sbr.rel (%p482) target = $region76
      $region75: #{tpu_custom_call.1} parent=71 // pred_region
        %p485 = scmp.lt.s32.totalorder %s23, 1
        %s486 = scalar_select %p485, %s23, 1
        %s487 = smul.addr %s486, 8
        %s488 = smul.addr %s487, 8
        %s489 = scalar_lea.vmem %s0, %s488
      $region76: #{tpu_custom_call.1} parent=71 // pred_fallthru
        _
      // Predicated region
      $region77: #{tpu_custom_call.1} parent=71 // pred_check
        %p490 = pneg %p69
      $region78: #{tpu_custom_call.1} parent=71 // pred_check_branch
        %492 = sbr.rel (%p490) target = $region80
      $region79: #{tpu_custom_call.1} parent=71 // pred_region
        %p493 = scmp.lt.s32.totalorder %s23, 1
        %s494 = scalar_select %p493, %s23, 1
        %s495 = smul.addr %s494, 4
        %s496 = scalar_lea.vmem %s1, %s495
      $region80: #{tpu_custom_call.1} parent=71 // pred_fallthru
        _
      // Predicated region
      $region81: #{tpu_custom_call.1} parent=71 // pred_check
        %p497 = pneg %p95
      $region82: #{tpu_custom_call.1} parent=71 // pred_check_branch
        %499 = sbr.rel (%p497) target = $region84
      $region83: #{tpu_custom_call.1} parent=71 // pred_region
        %p500 = scmp.lt.s32.totalorder %s23, 1
        %s501 = scalar_select %p500, %s23, 1
        %s502 = smul.addr %s501, 4
        %s503 = scalar_lea.vmem %s2, %s502
      $region84: #{tpu_custom_call.1} parent=71 // pred_fallthru
        _
    $region72: #{tpu_custom_call.1} parent=5 // pred_fallthru
      _
    %p504 = scmp.le.s32.totalorder 1, %s23
    %p505 = scmp.lt.s32.totalorder %s23, 3
    %p506 = pnand %p504, %p505
    %p507 = pneg %p506
    // Predicated region
    $region85: #{tpu_custom_call.1} parent=5 // pred_check
      _
    $region86: #{tpu_custom_call.1} parent=5 // pred_check_branch
      %509 = sbr.rel (%p506) target = $region88
    $region87: #{tpu_custom_call.1} parent=5 // pred_region
      %s510 = ssub.s32 %s23, 1
      %p511 = scmp.lt.s32.totalorder %s28, 1
      %s512 = scalar_select %p511, %s28, 1
      %s513 = smul.addr %s512, 8
      %s514 = smul.addr %s513, 8
      %s515 = scalar_lea.vmem %s0, %s514
      %p516 = pneg %p49
      %p517 = pneg %p46
      %p518 = scmp.lt.s32.totalorder %s28, 1
      %s519 = scalar_select %p518, %s28, 1
      %s520 = smul.addr %s519, 4
      %s521 = scalar_lea.vmem %s1, %s520
      %p522 = pneg %p75
      %p523 = pneg %p72
      %p524 = scmp.lt.s32.totalorder %s28, 1
      %s525 = scalar_select %p524, %s28, 1
      %s526 = smul.addr %s525, 4
      %s527 = scalar_lea.vmem %s2, %s526
      %p528 = pneg %p101
      %p529 = pneg %p98
      %p530 = pneg %p122
      %p531 = pneg %p119
      %p532 = pneg %p143
      %p533 = pneg %p140
      %p534 = pneg %p164
      %p535 = pneg %p161
      %p536 = pneg %p185
      %p537 = pneg %p182
      %p538 = pneg %p206
      %p539 = pneg %p203
      %p540 = pneg %p227
      %p541 = pneg %p224
      %p542 = pneg %p248
      %p543 = pneg %p245
      %p544 = pneg %p269
      %p545 = pneg %p266
      %p546 = pneg %p290
      %p547 = pneg %p287
      %p548 = pneg %p311
      %p549 = pneg %p308
      %p550 = pneg %p332
      %p551 = pneg %p329
      %p552 = pneg %p353
      %p553 = pneg %p350
      %p554 = pneg %p374
      %p555 = pneg %p371
      %p556 = pneg %p395
      %p557 = pneg %p392
      %p558 = pneg %p421
      %p559 = pneg %p418
      %p560 = scmp.lt.s32.totalorder %s28, 1
      %s561 = scalar_select %p560, %s28, 1
      %s562 = smul.addr %s561, 8
      %s563 = smul.addr %s562, 8
      %s564 = scalar_lea.vmem %s17, %s563
      %p565 = scmp.lt.s32.totalorder %s28, 1
      %s566 = scalar_select %p565, %s28, 1
      %s567 = smul.addr %s566, 8
      %s568 = smul.addr %s567, 8
      %s569 = scalar_lea.vmem %s0, %s568
      %p570 = scmp.lt.s32.totalorder %s28, 1
      %s571 = scalar_select %p570, %s28, 1
      %s572 = smul.addr %s571, 4
      %s573 = scalar_lea.vmem %s1, %s572
      %p574 = scmp.lt.s32.totalorder %s28, 1
      %s575 = scalar_select %p574, %s28, 1
      %s576 = smul.addr %s575, 4
      %s577 = scalar_lea.vmem %s2, %s576
      %p578 = scmp.lt.s32.totalorder %s28, 1
      %s579 = scalar_select %p578, %s28, 1
      %s580 = smul.addr %s579, 8
      %s581 = smul.addr %s580, 8
      %s582 = scalar_lea.vmem %s17, %s581
      %v584 = vld [vmem:[%s569] sm:$0xff]
      %v585 = vld [vmem:[%s569 + $0x8] sm:$0xff]
      %v586 = vld [vmem:[%s569 + $0x10] sm:$0xff]
      %v587 = vld [vmem:[%s569 + $0x18] sm:$0xff]
      %v588 = vld [vmem:[%s569 + $0x20] sm:$0xff]
      %v589 = vld [vmem:[%s569 + $0x28] sm:$0xff]
      %v590 = vld [vmem:[%s569 + $0x30] sm:$0xff]
      %v591 = vld [vmem:[%s569 + $0x38] sm:$0xff]
      %v592 = vld [vmem:[%s11] sm:$0xff]
      %v593 = vld [vmem:[%s11 + $0x8] sm:$0xff]
      %v594 = vld [vmem:[%s12] sm:$0xff]
      %v595 = vld [vmem:[%s13] sm:$0xff]
      %v596 = vld [vmem:[%s13 + $0x8] sm:$0xff]
      %v597 = vld [vmem:[%s13 + $0x10] sm:$0xff]
      %v598 = vld [vmem:[%s13 + $0x18] sm:$0xff]
      %v599 = vld [vmem:[%s13 + $0x20] sm:$0xff]
      %v600 = vld [vmem:[%s13 + $0x28] sm:$0xff]
      %v601 = vld [vmem:[%s13 + $0x30] sm:$0xff]
      %v602 = vld [vmem:[%s13 + $0x38] sm:$0xff]
      %v603 = vld [vmem:[%s14] sm:$0xff]
      %v604 = vld [vmem:[%s14 + $0x8] sm:$0xff]
      %v605 = vld [vmem:[%s14 + $0x10] sm:$0xff]
      %v606 = vld [vmem:[%s14 + $0x18] sm:$0xff]
      %v607 = vld [vmem:[%s14 + $0x20] sm:$0xff]
      %v608 = vld [vmem:[%s14 + $0x28] sm:$0xff]
      %v609 = vld [vmem:[%s14 + $0x30] sm:$0xff]
      %v610 = vld [vmem:[%s14 + $0x38] sm:$0xff]
      %v611 = vld [vmem:[%s3] sm:$0xf]
      %v612 = vld [vmem:[%s3 + $0x4] sm:$0xf]
      %v613 = vld [vmem:[%s3 + $0x8] sm:$0xf]
      %v614 = vld [vmem:[%s4] sm:$0x1]
      %v615 = vld [vmem:[%s5] sm:$0x1]
      %v616 = vld [vmem:[%s6] sm:$0x1]
      %v617 = vrot.slane %v584, 7
      %v618 = vrot.slane %v585, 7
      %v619 = vrot.slane %v586, 7
      %v620 = vrot.slane %v587, 7
      %v621 = vrot.slane %v588, 7
      %v622 = vrot.slane %v589, 7
      %v623 = vrot.slane %v590, 7
      %v624 = vrot.slane %v591, 7
      %v625 = vlaneseq
      %v626 = vshrl.u32 %v625, 7
      %vm627 = vcmp.lt.s32.totalorder %v626, 1
      %v628 = vsel %vm627, %v623, %v624
      %v629 = vsel %vm627, %v622, %v623
      %v630 = vsel %vm627, %v621, %v622
      %v631 = vsel %vm627, %v620, %v621
      %v632 = vsel %vm627, %v619, %v620
      %v633 = vsel %vm627, %v618, %v619
      %v634 = vsel %vm627, %v617, %v618
      %v635 = vsel %vm627, %v624, %v617
      %637 = vset.pattern.permute.xlu0 0
      %638 = vperm.xlu0 %637, %v595
      %v639 = vpop.permute.xlu0 %638
      %642 = vset.pattern.permute.xlu0 0
      %643 = vperm.xlu0 %642, %v596
      %v644 = vpop.permute.xlu0 %643
      %647 = vset.pattern.permute.xlu0 0
      %648 = vperm.xlu0 %647, %v597
      %v649 = vpop.permute.xlu0 %648
      %652 = vset.pattern.permute.xlu0 0
      %653 = vperm.xlu0 %652, %v598
      %v654 = vpop.permute.xlu0 %653
      %657 = vset.pattern.permute.xlu0 0
      %658 = vperm.xlu0 %657, %v599
      %v659 = vpop.permute.xlu0 %658
      %662 = vset.pattern.permute.xlu0 0
      %663 = vperm.xlu0 %662, %v600
      %v664 = vpop.permute.xlu0 %663
      %667 = vset.pattern.permute.xlu0 0
      %668 = vperm.xlu0 %667, %v601
      %v669 = vpop.permute.xlu0 %668
      %672 = vset.pattern.permute.xlu0 0
      %673 = vperm.xlu0 %672, %v602
      %v674 = vpop.permute.xlu0 %673
      %v676 = vmul.f32 %v635, %v639
      %v677 = vmul.f32 %v634, %v644
      %v678 = vmul.f32 %v633, %v649
      %v679 = vmul.f32 %v632, %v654
      %v680 = vmul.f32 %v631, %v659
      %v681 = vmul.f32 %v630, %v664
      %v682 = vmul.f32 %v629, %v669
      %v683 = vmul.f32 %v628, %v674
      %v684 = vrot.slane %v584, 1
      %v685 = vrot.slane %v585, 1
      %v686 = vrot.slane %v586, 1
      %v687 = vrot.slane %v587, 1
      %v688 = vrot.slane %v588, 1
      %v689 = vrot.slane %v589, 1
      %v690 = vrot.slane %v590, 1
      %v691 = vrot.slane %v591, 1
      %vm692 = vcmp.lt.s32.totalorder %v626, 7
      %v693 = vsel %vm692, %v690, %v691
      %v694 = vsel %vm692, %v689, %v690
      %v695 = vsel %vm692, %v688, %v689
      %v696 = vsel %vm692, %v687, %v688
      %v697 = vsel %vm692, %v686, %v687
      %v698 = vsel %vm692, %v685, %v686
      %v699 = vsel %vm692, %v684, %v685
      %v700 = vsel %vm692, %v691, %v684
      %702 = vset.pattern.permute.xlu0 0
      %703 = vperm.xlu0 %702, %v603
      %v704 = vpop.permute.xlu0 %703
      %707 = vset.pattern.permute.xlu0 0
      %708 = vperm.xlu0 %707, %v604
      %v709 = vpop.permute.xlu0 %708
      %712 = vset.pattern.permute.xlu0 0
      %713 = vperm.xlu0 %712, %v605
      %v714 = vpop.permute.xlu0 %713
      %717 = vset.pattern.permute.xlu0 0
      %718 = vperm.xlu0 %717, %v606
      %v719 = vpop.permute.xlu0 %718
      %722 = vset.pattern.permute.xlu0 0
      %723 = vperm.xlu0 %722, %v607
      %v724 = vpop.permute.xlu0 %723
      %727 = vset.pattern.permute.xlu0 0
      %728 = vperm.xlu0 %727, %v608
      %v729 = vpop.permute.xlu0 %728
      %732 = vset.pattern.permute.xlu0 0
      %733 = vperm.xlu0 %732, %v609
      %v734 = vpop.permute.xlu0 %733
      %737 = vset.pattern.permute.xlu0 0
      %738 = vperm.xlu0 %737, %v610
      %v739 = vpop.permute.xlu0 %738
      %v741 = vmul.f32 %v699, %v704
      %v742 = vmul.f32 %v698, %v709
      %v743 = vmul.f32 %v697, %v714
      %v744 = vmul.f32 %v696, %v719
      %v745 = vmul.f32 %v695, %v724
      %v746 = vmul.f32 %v694, %v729
      %v747 = vmul.f32 %v693, %v734
      %v748 = vmul.f32 %v700, %v739
      %757 = vrot.lane.b32.xlu0 %v584, 8
      %v758 = vpop.permute.xlu0 %757
      %759 = vrot.lane.b32.xlu0 %v585, 8
      %v760 = vpop.permute.xlu0 %759
      %761 = vrot.lane.b32.xlu0 %v586, 8
      %v762 = vpop.permute.xlu0 %761
      %763 = vrot.lane.b32.xlu0 %v587, 8
      %v764 = vpop.permute.xlu0 %763
      %765 = vrot.lane.b32.xlu0 %v588, 8
      %v766 = vpop.permute.xlu0 %765
      %767 = vrot.lane.b32.xlu0 %v589, 8
      %v768 = vpop.permute.xlu0 %767
      %769 = vrot.lane.b32.xlu0 %v590, 8
      %v770 = vpop.permute.xlu0 %769
      %771 = vrot.lane.b32.xlu0 %v591, 8
      %v772 = vpop.permute.xlu0 %771
      %789 = vrot.lane.b32.xlu0 %v741, 16
      %v790 = vpop.permute.xlu0 %789
      %791 = vrot.lane.b32.xlu0 %v742, 16
      %v792 = vpop.permute.xlu0 %791
      %793 = vrot.lane.b32.xlu0 %v743, 16
      %v794 = vpop.permute.xlu0 %793
      %795 = vrot.lane.b32.xlu0 %v744, 16
      %v796 = vpop.permute.xlu0 %795
      %797 = vrot.lane.b32.xlu0 %v745, 16
      %v798 = vpop.permute.xlu0 %797
      %799 = vrot.lane.b32.xlu0 %v746, 16
      %v800 = vpop.permute.xlu0 %799
      %801 = vrot.lane.b32.xlu0 %v747, 16
      %v802 = vpop.permute.xlu0 %801
      %803 = vrot.lane.b32.xlu0 %v748, 16
      %v804 = vpop.permute.xlu0 %803
      %vm813 = vcmask 64512
      %v814 = vsel %vm813, %v676, %v758
      %v815 = vsel %vm813, %v677, %v760
      %v816 = vsel %vm813, %v678, %v762
      %v817 = vsel %vm813, %v679, %v764
      %v818 = vsel %vm813, %v680, %v766
      %v819 = vsel %vm813, %v681, %v768
      %v820 = vsel %vm813, %v682, %v770
      %v821 = vsel %vm813, %v683, %v772
      %vm822 = vcmask 130048
      %v823 = vsel %vm822, %v814, %v790
      %v824 = vsel %vm822, %v815, %v792
      %v825 = vsel %vm822, %v816, %v794
      %v826 = vsel %vm822, %v817, %v796
      %v827 = vsel %vm822, %v818, %v798
      %v828 = vsel %vm822, %v819, %v800
      %v829 = vsel %vm822, %v820, %v802
      %v830 = vsel %vm822, %v821, %v804
      %v831 = vpack.c.bf16 %v824, %v823
      %v832 = vpack.c.bf16 %v826, %v825
      %v833 = vpack.c.bf16 %v828, %v827
      %v834 = vpack.c.bf16 %v830, %v829
      %v836 = vperm.slane %v614, 0
      %v841 = vunpack.c.l.b16 %v611
      %v842 = vunpack.c.l.b16 %v612
      %v843 = vunpack.c.l.b16 %v613
      %v844 = vpack.c.b16 %v842, %v841
      %v845 = vpack.c.b16 %v843, %v843
      %vm847 = vcmask 195584
      %v849 = vsel %vm847, %v831, 0
      %v852 = vsel %vm847, %v832, 0
      %v855 = vsel %vm847, %v833, 0
      %v858 = vsel %vm847, %v834, 0
      %vm860 = vcmask 1043456
      %v862 = vsel %vm860, %v845, 0
      %864 = vmatpush.bf16.msra.mxu0 0
      %865 = vmatpush.bf16.msra.mxu0 0
      %866 = vmatpush.bf16.msra.mxu0 0
      %867 = vmatpush.bf16.msra.mxu0 0
      %868 = vmatpush.bf16.msra.mxu0 0
      %869 = vmatpush.bf16.msra.mxu0 0
      %870 = vmatpush.bf16.msra.mxu0 %v862
      %871 = vmatpush.bf16.msra.mxu0 %v844
      %872 = vmatmul.bf16.gmra.mxu0 %v849
      %v873 = vpop.f32.mrf.mxu0
      %v874 = vadd.f32 %v836, %v873
      %v875 = vpop.f32.mrf.mxu0
      %v876 = vadd.f32 %v836, %v875
      %877 = vmatmul.bf16.gmra.mxu0 %v852
      %v878 = vpop.f32.mrf.mxu0
      %v879 = vadd.f32 %v836, %v878
      %v880 = vpop.f32.mrf.mxu0
      %v881 = vadd.f32 %v836, %v880
      %882 = vmatmul.bf16.gmra.mxu0 %v855
      %v883 = vpop.f32.mrf.mxu0
      %v884 = vadd.f32 %v836, %v883
      %v885 = vpop.f32.mrf.mxu0
      %v886 = vadd.f32 %v836, %v885
      %887 = vmatmul.bf16.gmra.mxu0 %v858
      %v888 = vpop.f32.mrf.mxu0
      %v889 = vadd.f32 %v836, %v888
      %v890 = vpop.f32.mrf.mxu0
      %v891 = vadd.f32 %v836, %v890
      %892 = vdwg.mxu0
      %v893 = vsel %vm822, %v874, 0.0
      %v894 = vsel %vm822, %v876, 0.0
      %v895 = vadd.f32 %v893, %v894
      %v896 = vrot.slane %v895, 4
      %v897 = vadd.f32 %v895, %v896
      %v898 = vrot.slane %v897, 2
      %v899 = vadd.f32 %v897, %v898
      %v900 = vrot.slane %v899, 1
      %v901 = vadd.f32 %v899, %v900
      %v902 = vsel %vm822, %v879, 0.0
      %v903 = vsel %vm822, %v881, 0.0
      %v904 = vadd.f32 %v902, %v903
      %v905 = vrot.slane %v904, 4
      %v906 = vadd.f32 %v904, %v905
      %v907 = vrot.slane %v906, 2
      %v908 = vadd.f32 %v906, %v907
      %v909 = vrot.slane %v908, 1
      %v910 = vadd.f32 %v908, %v909
      %v911 = vsel %vm822, %v884, 0.0
      %v912 = vsel %vm822, %v886, 0.0
      %v913 = vadd.f32 %v911, %v912
      %v914 = vrot.slane %v913, 4
      %v915 = vadd.f32 %v913, %v914
      %v916 = vrot.slane %v915, 2
      %v917 = vadd.f32 %v915, %v916
      %v918 = vrot.slane %v917, 1
      %v919 = vadd.f32 %v917, %v918
      %v920 = vsel %vm822, %v889, 0.0
      %v921 = vsel %vm822, %v891, 0.0
      %v922 = vadd.f32 %v920, %v921
      %v923 = vrot.slane %v922, 4
      %v924 = vadd.f32 %v922, %v923
      %v925 = vrot.slane %v924, 2
      %v926 = vadd.f32 %v924, %v925
      %v927 = vrot.slane %v926, 1
      %v928 = vadd.f32 %v926, %v927
      %v929 = vmul.f32 %v874, %v874
      %v930 = vmul.f32 %v876, %v876
      %v931 = vmul.f32 %v879, %v879
      %v932 = vmul.f32 %v881, %v881
      %v933 = vmul.f32 %v884, %v884
      %v934 = vmul.f32 %v886, %v886
      %v935 = vmul.f32 %v889, %v889
      %v936 = vmul.f32 %v891, %v891
      %v937 = vsel %vm822, %v929, 0.0
      %v938 = vsel %vm822, %v930, 0.0
      %v939 = vadd.f32 %v937, %v938
      %v940 = vrot.slane %v939, 4
      %v941 = vadd.f32 %v939, %v940
      %v942 = vrot.slane %v941, 2
      %v943 = vadd.f32 %v941, %v942
      %v944 = vrot.slane %v943, 1
      %v945 = vadd.f32 %v943, %v944
      %v946 = vsel %vm822, %v931, 0.0
      %v947 = vsel %vm822, %v932, 0.0
      %v948 = vadd.f32 %v946, %v947
      %v949 = vrot.slane %v948, 4
      %v950 = vadd.f32 %v948, %v949
      %v951 = vrot.slane %v950, 2
      %v952 = vadd.f32 %v950, %v951
      %v953 = vrot.slane %v952, 1
      %v954 = vadd.f32 %v952, %v953
      %v955 = vsel %vm822, %v933, 0.0
      %v956 = vsel %vm822, %v934, 0.0
      %v957 = vadd.f32 %v955, %v956
      %v958 = vrot.slane %v957, 4
      %v959 = vadd.f32 %v957, %v958
      %v960 = vrot.slane %v959, 2
      %v961 = vadd.f32 %v959, %v960
      %v962 = vrot.slane %v961, 1
      %v963 = vadd.f32 %v961, %v962
      %v964 = vsel %vm822, %v935, 0.0
      %v965 = vsel %vm822, %v936, 0.0
      %v966 = vadd.f32 %v964, %v965
      %v967 = vrot.slane %v966, 4
      %v968 = vadd.f32 %v966, %v967
      %v969 = vrot.slane %v968, 2
      %v970 = vadd.f32 %v968, %v969
      %v971 = vrot.slane %v970, 1
      %v972 = vadd.f32 %v970, %v971
      %vm977 = vcmask 1041409
      %v978 = vsel %vm977, %v910, %v901
      %vm979 = vcmask 1042434
      %v980 = vsel %vm979, %v919, %v978
      %vm981 = vcmask 1043459
      %v982 = vsel %vm981, %v928, %v980
      %v983 = vsel %vm822, %v982, 0
      %985 = vmatpush.msra.mxu0 0.0
      %986 = vmatpush.msra.mxu0 0.0
      %987 = vmatpush.msra.mxu0 0.0
      %988 = vmatpush.msra.mxu0 0.0
      %989 = vmatpush.msra.mxu0 0.0
      %990 = vmatpush.msra.mxu0 0.0
      %991 = vmatpush.msra.mxu0 0.0
      %992 = vmatpush.msra.mxu0 0.0
      %993 = vmatpush.msra.mxu0 0.0
      %994 = vmatpush.msra.mxu0 0.0
      %995 = vmatpush.msra.mxu0 0.0
      %996 = vmatpush.msra.mxu0 0.0
      %997 = vmatpush.msra.mxu0 0.0
      %998 = vmatpush.msra.mxu0 0.0
      %999 = vmatpush.msra.mxu0 %v593
      %1000 = vmatpush.msra.mxu0 %v592
      %1001 = vmatmul.f32.gmra.mxu0 %v983
      %v1002 = vpop.f32.mrf.mxu0
      %v1003 = vadd.f32 0.0, %v1002
      %1004 = vdwg.mxu0
      %v1009 = vsel %vm977, %v954, %v945
      %v1010 = vsel %vm979, %v963, %v1009
      %v1011 = vsel %vm981, %v972, %v1010
      %v1012 = vsel %vm822, %v1011, 0
      %1014 = vmatpush.msra.mxu0 0.0
      %1015 = vmatpush.msra.mxu0 0.0
      %1016 = vmatpush.msra.mxu0 0.0
      %1017 = vmatpush.msra.mxu0 0.0
      %1018 = vmatpush.msra.mxu0 0.0
      %1019 = vmatpush.msra.mxu0 0.0
      %1020 = vmatpush.msra.mxu0 0.0
      %1021 = vmatpush.msra.mxu0 0.0
      %1022 = vmatpush.msra.mxu0 0.0
      %1023 = vmatpush.msra.mxu0 0.0
      %1024 = vmatpush.msra.mxu0 0.0
      %1025 = vmatpush.msra.mxu0 0.0
      %1026 = vmatpush.msra.mxu0 0.0
      %1027 = vmatpush.msra.mxu0 0.0
      %1028 = vmatpush.msra.mxu0 %v593
      %1029 = vmatpush.msra.mxu0 %v592
      %1030 = vmatmul.f32.gmra.mxu0 %v1012
      %v1031 = vpop.f32.mrf.mxu0
      %v1032 = vadd.f32 0.0, %v1031
      %1033 = vdwg.mxu0
      %v1034 = vmul.f32 %v1003, 0.03125
      %v1035 = vmul.f32 %v1032, 0.03125
      %v1036 = vmul.f32 %v1034, %v1034
      %v1037 = vsub.f32 %v1035, %v1036
      %v1038 = vmax.f32 %v1037, 0.0
      %v1039 = vadd.f32 %v1038, 1e-05
      %v1040 = vrsqrt.pop %v1039
      %v1041 = vmul.f32 %v1040, %v1039
      %v1042 = vmul.f32 %v1041, %v1040
      %v1043 = vmul.f32 0.5, %v1042
      %v1044 = vsub.f32 1.5, %v1043
      %v1045 = vmul.f32 %v1040, %v1044
      %vm1046 = vweird.f32 %v1039
      %vm1047 = vweird.f32 %v1040
      %vm1048 = vmor %vm1046, %vm1047
      %v1049 = vsel %vm1048, %v1040, %v1045
      %v1051 = vsel %vm813, %v1034, 0
      %1053 = vmatpush.msra.mxu0 0.0
      %1054 = vmatpush.msra.mxu0 0.0
      %1055 = vmatpush.msra.mxu0 0.0
      %1056 = vmatpush.msra.mxu0 0.0
      %1057 = vmatpush.msra.mxu0 0.0
      %1058 = vmatpush.msra.mxu0 0.0
      %1059 = vmatpush.msra.mxu0 0.0
      %1060 = vmatpush.msra.mxu0 0.0
      %1061 = vmatpush.msra.mxu0 0.0
      %1062 = vmatpush.msra.mxu0 0.0
      %1063 = vmatpush.msra.mxu0 0.0
      %1064 = vmatpush.msra.mxu0 0.0
      %1065 = vmatpush.msra.mxu0 0.0
      %1066 = vmatpush.msra.mxu0 0.0
      %1067 = vmatpush.msra.mxu0 0.0
      %1068 = vmatpush.msra.mxu0 %v594
      %1069 = vmatmul.f32.gmra.mxu0 %v1051
      %v1070 = vpop.f32.mrf.mxu0
      %v1071 = vadd.f32 0.0, %v1070
      %1072 = vdwg.mxu0
      %v1074 = vsel %vm813, %v1049, 0
      %1076 = vmatpush.msra.mxu0 0.0
      %1077 = vmatpush.msra.mxu0 0.0
      %1078 = vmatpush.msra.mxu0 0.0
      %1079 = vmatpush.msra.mxu0 0.0
      %1080 = vmatpush.msra.mxu0 0.0
      %1081 = vmatpush.msra.mxu0 0.0
      %1082 = vmatpush.msra.mxu0 0.0
      %1083 = vmatpush.msra.mxu0 0.0
      %1084 = vmatpush.msra.mxu0 0.0
      %1085 = vmatpush.msra.mxu0 0.0
      %1086 = vmatpush.msra.mxu0 0.0
      %1087 = vmatpush.msra.mxu0 0.0
      %1088 = vmatpush.msra.mxu0 0.0
      %1089 = vmatpush.msra.mxu0 0.0
      %1090 = vmatpush.msra.mxu0 0.0
      %1091 = vmatpush.msra.mxu0 %v594
      %1092 = vmatmul.f32.gmra.mxu0 %v1074
      %v1093 = vpop.f32.mrf.mxu0
      %v1094 = vadd.f32 0.0, %v1093
      %1095 = vdwg.mxu0
      %v1097 = vperm.slane %v615, 0
      %v1099 = vmul.f32 %v1094, %v1097
      %v1100 = vmul.f32 %v1071, %v1099
      %v1102 = vperm.slane %v616, 0
      %v1104 = vsub.f32 %v1102, %v1100
      %v1106 = vrot.slane %v1099, 1
      %v1107 = vrot.slane %v1099, 2
      %v1108 = vrot.slane %v1099, 3
      %v1109 = vperm.slane %v1099, 0
      %v1110 = vperm.slane %v1106, 0
      %v1111 = vperm.slane %v1107, 0
      %v1112 = vperm.slane %v1108, 0
      %v1117 = vmul.f32 %v874, %v1109
      %v1118 = vmul.f32 %v876, %v1109
      %v1119 = vmul.f32 %v879, %v1110
      %v1120 = vmul.f32 %v881, %v1110
      %v1121 = vmul.f32 %v884, %v1111
      %v1122 = vmul.f32 %v886, %v1111
      %v1123 = vmul.f32 %v889, %v1112
      %v1124 = vmul.f32 %v891, %v1112
      %v1126 = vrot.slane %v1104, 1
      %v1127 = vrot.slane %v1104, 2
      %v1128 = vrot.slane %v1104, 3
      %v1129 = vperm.slane %v1104, 0
      %v1130 = vperm.slane %v1126, 0
      %v1131 = vperm.slane %v1127, 0
      %v1132 = vperm.slane %v1128, 0
      %v1137 = vadd.f32 %v1117, %v1129
      %v1138 = vadd.f32 %v1118, %v1129
      %v1139 = vadd.f32 %v1119, %v1130
      %v1140 = vadd.f32 %v1120, %v1130
      %v1141 = vadd.f32 %v1121, %v1131
      %v1142 = vadd.f32 %v1122, %v1131
      %v1143 = vadd.f32 %v1123, %v1132
      %v1144 = vadd.f32 %v1124, %v1132
      %v1145 = vmin.f32 %v1137, 20.0
      %v1146 = vmin.f32 %v1138, 20.0
      %v1147 = vmin.f32 %v1139, 20.0
      %v1148 = vmin.f32 %v1140, 20.0
      %v1149 = vmin.f32 %v1141, 20.0
      %v1150 = vmin.f32 %v1142, 20.0
      %v1151 = vmin.f32 %v1143, 20.0
      %v1152 = vmin.f32 %v1144, 20.0
      %v1153 = vmul.f32 %v1145, 1.442695
      %v1154 = vpow.pop %v1153
      %v1155 = vmul.f32 %v1146, 1.442695
      %v1156 = vpow.pop %v1155
      %v1157 = vmul.f32 %v1147, 1.442695
      %v1158 = vpow.pop %v1157
      %v1159 = vmul.f32 %v1148, 1.442695
      %v1160 = vpow.pop %v1159
      %v1161 = vmul.f32 %v1149, 1.442695
      %v1162 = vpow.pop %v1161
      %v1163 = vmul.f32 %v1150, 1.442695
      %v1164 = vpow.pop %v1163
      %v1165 = vmul.f32 %v1151, 1.442695
      %v1166 = vpow.pop %v1165
      %v1167 = vmul.f32 %v1152, 1.442695
      %v1168 = vpow.pop %v1167
      %v1169 = vadd.f32 %v1154, 2.0
      %v1170 = vadd.f32 %v1156, 2.0
      %v1171 = vadd.f32 %v1158, 2.0
      %v1172 = vadd.f32 %v1160, 2.0
      %v1173 = vadd.f32 %v1162, 2.0
      %v1174 = vadd.f32 %v1164, 2.0
      %v1175 = vadd.f32 %v1166, 2.0
      %v1176 = vadd.f32 %v1168, 2.0
      %v1177 = vmul.f32 %v1154, %v1169
      %v1178 = vmul.f32 %v1156, %v1170
      %v1179 = vmul.f32 %v1158, %v1171
      %v1180 = vmul.f32 %v1160, %v1172
      %v1181 = vmul.f32 %v1162, %v1173
      %v1182 = vmul.f32 %v1164, %v1174
      %v1183 = vmul.f32 %v1166, %v1175
      %v1184 = vmul.f32 %v1168, %v1176
      %v1185 = vadd.f32 %v1177, 2.0
      %v1186 = vadd.f32 %v1178, 2.0
      %v1187 = vadd.f32 %v1179, 2.0
      %v1188 = vadd.f32 %v1180, 2.0
      %v1189 = vadd.f32 %v1181, 2.0
      %v1190 = vadd.f32 %v1182, 2.0
      %v1191 = vadd.f32 %v1183, 2.0
      %v1192 = vadd.f32 %v1184, 2.0
      %v1193 = vrcp.pop %v1185
      %v1194 = vrcp.pop %v1186
      %v1195 = vrcp.pop %v1187
      %v1196 = vrcp.pop %v1188
      %v1197 = vrcp.pop %v1189
      %v1198 = vrcp.pop %v1190
      %v1199 = vrcp.pop %v1191
      %v1200 = vrcp.pop %v1192
      %v1201 = vmul.f32 %v1177, %v1193
      %v1202 = vmul.f32 %v1178, %v1194
      %v1203 = vmul.f32 %v1179, %v1195
      %v1204 = vmul.f32 %v1180, %v1196
      %v1205 = vmul.f32 %v1181, %v1197
      %v1206 = vmul.f32 %v1182, %v1198
      %v1207 = vmul.f32 %v1183, %v1199
      %v1208 = vmul.f32 %v1184, %v1200
      %v1209 = vmul.f32 %v1137, %v1201
      %v1210 = vmul.f32 %v1138, %v1202
      %v1211 = vmul.f32 %v1139, %v1203
      %v1212 = vmul.f32 %v1140, %v1204
      %v1213 = vmul.f32 %v1141, %v1205
      %v1214 = vmul.f32 %v1142, %v1206
      %v1215 = vmul.f32 %v1143, %v1207
      %v1216 = vmul.f32 %v1144, %v1208
      %v1217 = vld [vmem:[%s573] sm:$0xf]
      %v1219 = vrot.slane %v1217, 1
      %v1220 = vrot.slane %v1217, 2
      %v1221 = vrot.slane %v1217, 3
      %v1222 = vperm.slane %v1217, 0
      %v1223 = vperm.slane %v1219, 0
      %v1224 = vperm.slane %v1220, 0
      %v1225 = vperm.slane %v1221, 0
      %v1230 = vmul.f32 %v1222, %v1209
      %v1231 = vmul.f32 %v1222, %v1210
      %v1232 = vmul.f32 %v1223, %v1211
      %v1233 = vmul.f32 %v1223, %v1212
      %v1234 = vmul.f32 %v1224, %v1213
      %v1235 = vmul.f32 %v1224, %v1214
      %v1236 = vmul.f32 %v1225, %v1215
      %v1237 = vmul.f32 %v1225, %v1216
      %v1238 = vld [vmem:[%s577] sm:$0xf]
      %v1240 = vrot.slane %v1238, 1
      %v1241 = vrot.slane %v1238, 2
      %v1242 = vrot.slane %v1238, 3
      %v1243 = vperm.slane %v1238, 0
      %v1244 = vperm.slane %v1240, 0
      %v1245 = vperm.slane %v1241, 0
      %v1246 = vperm.slane %v1242, 0
      %v1251 = vadd.f32 %v1230, %v1243
      %v1252 = vadd.f32 %v1231, %v1243
      %v1253 = vadd.f32 %v1232, %v1244
      %v1254 = vadd.f32 %v1233, %v1244
      %v1255 = vadd.f32 %v1234, %v1245
      %v1256 = vadd.f32 %v1235, %v1245
      %v1257 = vadd.f32 %v1236, %v1246
      %v1258 = vadd.f32 %v1237, %v1246
      %v1259 = vld [vmem:[%s7] sm:$0xf]
      %v1260 = vld [vmem:[%s7 + $0x4] sm:$0xf]
      %v1261 = vld [vmem:[%s7 + $0x8] sm:$0xf]
      %v1262 = vld [vmem:[%s7 + $0xc] sm:$0xf]
      %v1263 = vld [vmem:[%s7 + $0x10] sm:$0xf]
      %v1264 = vld [vmem:[%s7 + $0x14] sm:$0xf]
      %v1265 = vld [vmem:[%s8] sm:$0x1]
      %v1266 = vld [vmem:[%s9] sm:$0x1]
      %v1267 = vld [vmem:[%s10] sm:$0x1]
      %v1268 = vrot.slane %v1251, 7
      %v1269 = vrot.slane %v1252, 7
      %v1270 = vrot.slane %v1253, 7
      %v1271 = vrot.slane %v1254, 7
      %v1272 = vrot.slane %v1255, 7
      %v1273 = vrot.slane %v1256, 7
      %v1274 = vrot.slane %v1257, 7
      %v1275 = vrot.slane %v1258, 7
      %v1276 = vsel %vm627, %v1274, %v1275
      %v1277 = vsel %vm627, %v1273, %v1274
      %v1278 = vsel %vm627, %v1272, %v1273
      %v1279 = vsel %vm627, %v1271, %v1272
      %v1280 = vsel %vm627, %v1270, %v1271
      %v1281 = vsel %vm627, %v1269, %v1270
      %v1282 = vsel %vm627, %v1268, %v1269
      %v1283 = vsel %vm627, %v1275, %v1268
      %v1284 = vmul.f32 %v1283, %v639
      %v1285 = vmul.f32 %v1282, %v644
      %v1286 = vmul.f32 %v1281, %v649
      %v1287 = vmul.f32 %v1280, %v654
      %v1288 = vmul.f32 %v1279, %v659
      %v1289 = vmul.f32 %v1278, %v664
      %v1290 = vmul.f32 %v1277, %v669
      %v1291 = vmul.f32 %v1276, %v674
      %v1292 = vrot.slane %v1251, 1
      %v1293 = vrot.slane %v1252, 1
      %v1294 = vrot.slane %v1253, 1
      %v1295 = vrot.slane %v1254, 1
      %v1296 = vrot.slane %v1255, 1
      %v1297 = vrot.slane %v1256, 1
      %v1298 = vrot.slane %v1257, 1
      %v1299 = vrot.slane %v1258, 1
      %v1300 = vsel %vm692, %v1298, %v1299
      %v1301 = vsel %vm692, %v1297, %v1298
      %v1302 = vsel %vm692, %v1296, %v1297
      %v1303 = vsel %vm692, %v1295, %v1296
      %v1304 = vsel %vm692, %v1294, %v1295
      %v1305 = vsel %vm692, %v1293, %v1294
      %v1306 = vsel %vm692, %v1292, %v1293
      %v1307 = vsel %vm692, %v1299, %v1292
      %v1308 = vmul.f32 %v1306, %v704
      %v1309 = vmul.f32 %v1305, %v709
      %v1310 = vmul.f32 %v1304, %v714
      %v1311 = vmul.f32 %v1303, %v719
      %v1312 = vmul.f32 %v1302, %v724
      %v1313 = vmul.f32 %v1301, %v729
      %v1314 = vmul.f32 %v1300, %v734
      %v1315 = vmul.f32 %v1307, %v739
      %1324 = vrot.lane.b32.xlu0 %v1251, 16
      %v1325 = vpop.permute.xlu0 %1324
      %1326 = vrot.lane.b32.xlu0 %v1252, 16
      %v1327 = vpop.permute.xlu0 %1326
      %1328 = vrot.lane.b32.xlu0 %v1253, 16
      %v1329 = vpop.permute.xlu0 %1328
      %1330 = vrot.lane.b32.xlu0 %v1254, 16
      %v1331 = vpop.permute.xlu0 %1330
      %1332 = vrot.lane.b32.xlu0 %v1255, 16
      %v1333 = vpop.permute.xlu0 %1332
      %1334 = vrot.lane.b32.xlu0 %v1256, 16
      %v1335 = vpop.permute.xlu0 %1334
      %1336 = vrot.lane.b32.xlu0 %v1257, 16
      %v1337 = vpop.permute.xlu0 %1336
      %1338 = vrot.lane.b32.xlu0 %v1258, 16
      %v1339 = vpop.permute.xlu0 %1338
      %1356 = vrot.lane.b32.xlu0 %v1308, 32
      %v1357 = vpop.permute.xlu0 %1356
      %1358 = vrot.lane.b32.xlu0 %v1309, 32
      %v1359 = vpop.permute.xlu0 %1358
      %1360 = vrot.lane.b32.xlu0 %v1310, 32
      %v1361 = vpop.permute.xlu0 %1360
      %1362 = vrot.lane.b32.xlu0 %v1311, 32
      %v1363 = vpop.permute.xlu0 %1362
      %1364 = vrot.lane.b32.xlu0 %v1312, 32
      %v1365 = vpop.permute.xlu0 %1364
      %1366 = vrot.lane.b32.xlu0 %v1313, 32
      %v1367 = vpop.permute.xlu0 %1366
      %1368 = vrot.lane.b32.xlu0 %v1314, 32
      %v1369 = vpop.permute.xlu0 %1368
      %1370 = vrot.lane.b32.xlu0 %v1315, 32
      %v1371 = vpop.permute.xlu0 %1370
      %v1380 = vsel %vm822, %v1284, %v1325
      %v1381 = vsel %vm822, %v1285, %v1327
      %v1382 = vsel %vm822, %v1286, %v1329
      %v1383 = vsel %vm822, %v1287, %v1331
      %v1384 = vsel %vm822, %v1288, %v1333
      %v1385 = vsel %vm822, %v1289, %v1335
      %v1386 = vsel %vm822, %v1290, %v1337
      %v1387 = vsel %vm822, %v1291, %v1339
      %vm1388 = vcmask 261120
      %v1389 = vsel %vm1388, %v1380, %v1357
      %v1390 = vsel %vm1388, %v1381, %v1359
      %v1391 = vsel %vm1388, %v1382, %v1361
      %v1392 = vsel %vm1388, %v1383, %v1363
      %v1393 = vsel %vm1388, %v1384, %v1365
      %v1394 = vsel %vm1388, %v1385, %v1367
      %v1395 = vsel %vm1388, %v1386, %v1369
      %v1396 = vsel %vm1388, %v1387, %v1371
      %v1397 = vpack.c.bf16 %v1390, %v1389
      %v1398 = vpack.c.bf16 %v1392, %v1391
      %v1399 = vpack.c.bf16 %v1394, %v1393
      %v1400 = vpack.c.bf16 %v1396, %v1395
      %v1402 = vperm.slane %v1265, 0
      %v1410 = vunpack.c.l.b16 %v1259
      %v1411 = vunpack.c.l.b16 %v1260
      %v1412 = vunpack.c.l.b16 %v1261
      %v1413 = vunpack.c.l.b16 %v1262
      %v1414 = vunpack.c.l.b16 %v1263
      %v1415 = vunpack.c.l.b16 %v1264
      %v1416 = vpack.c.b16 %v1411, %v1410
      %v1417 = vpack.c.b16 %v1413, %v1412
      %v1418 = vpack.c.b16 %v1415, %v1414
      %vm1422 = vcmask 392192
      %v1424 = vsel %vm1422, %v1397, 0
      %v1427 = vsel %vm1422, %v1398, 0
      %v1430 = vsel %vm1422, %v1399, 0
      %v1433 = vsel %vm1422, %v1400, 0
      %1435 = vmatpush.bf16.msra.mxu0 0
      %1436 = vmatpush.bf16.msra.mxu0 0
      %1437 = vmatpush.bf16.msra.mxu0 0
      %1438 = vmatpush.bf16.msra.mxu0 0
      %1439 = vmatpush.bf16.msra.mxu0 0
      %1440 = vmatpush.bf16.msra.mxu0 %v1418
      %1441 = vmatpush.bf16.msra.mxu0 %v1417
      %1442 = vmatpush.bf16.msra.mxu0 %v1416
      %1443 = vmatmul.bf16.gmra.mxu0 %v1424
      %v1444 = vpop.f32.mrf.mxu0
      %v1445 = vadd.f32 %v1402, %v1444
      %v1446 = vpop.f32.mrf.mxu0
      %v1447 = vadd.f32 %v1402, %v1446
      %1448 = vmatmul.bf16.gmra.mxu0 %v1427
      %v1449 = vpop.f32.mrf.mxu0
      %v1450 = vadd.f32 %v1402, %v1449
      %v1451 = vpop.f32.mrf.mxu0
      %v1452 = vadd.f32 %v1402, %v1451
      %1453 = vmatmul.bf16.gmra.mxu0 %v1430
      %v1454 = vpop.f32.mrf.mxu0
      %v1455 = vadd.f32 %v1402, %v1454
      %v1456 = vpop.f32.mrf.mxu0
      %v1457 = vadd.f32 %v1402, %v1456
      %1458 = vmatmul.bf16.gmra.mxu0 %v1433
      %v1459 = vpop.f32.mrf.mxu0
      %v1460 = vadd.f32 %v1402, %v1459
      %v1461 = vpop.f32.mrf.mxu0
      %v1462 = vadd.f32 %v1402, %v1461
      %1463 = vdwg.mxu0
      %v1464 = vsel %vm822, %v1445, 0.0
      %v1465 = vsel %vm822, %v1447, 0.0
      %v1466 = vadd.f32 %v1464, %v1465
      %v1467 = vrot.slane %v1466, 4
      %v1468 = vadd.f32 %v1466, %v1467
      %v1469 = vrot.slane %v1468, 2
      %v1470 = vadd.f32 %v1468, %v1469
      %v1471 = vrot.slane %v1470, 1
      %v1472 = vadd.f32 %v1470, %v1471
      %v1473 = vsel %vm822, %v1450, 0.0
      %v1474 = vsel %vm822, %v1452, 0.0
      %v1475 = vadd.f32 %v1473, %v1474
      %v1476 = vrot.slane %v1475, 4
      %v1477 = vadd.f32 %v1475, %v1476
      %v1478 = vrot.slane %v1477, 2
      %v1479 = vadd.f32 %v1477, %v1478
      %v1480 = vrot.slane %v1479, 1
      %v1481 = vadd.f32 %v1479, %v1480
      %v1482 = vsel %vm822, %v1455, 0.0
      %v1483 = vsel %vm822, %v1457, 0.0
      %v1484 = vadd.f32 %v1482, %v1483
      %v1485 = vrot.slane %v1484, 4
      %v1486 = vadd.f32 %v1484, %v1485
      %v1487 = vrot.slane %v1486, 2
      %v1488 = vadd.f32 %v1486, %v1487
      %v1489 = vrot.slane %v1488, 1
      %v1490 = vadd.f32 %v1488, %v1489
      %v1491 = vsel %vm822, %v1460, 0.0
      %v1492 = vsel %vm822, %v1462, 0.0
      %v1493 = vadd.f32 %v1491, %v1492
      %v1494 = vrot.slane %v1493, 4
      %v1495 = vadd.f32 %v1493, %v1494
      %v1496 = vrot.slane %v1495, 2
      %v1497 = vadd.f32 %v1495, %v1496
      %v1498 = vrot.slane %v1497, 1
      %v1499 = vadd.f32 %v1497, %v1498
      %v1500 = vmul.f32 %v1445, %v1445
      %v1501 = vmul.f32 %v1447, %v1447
      %v1502 = vmul.f32 %v1450, %v1450
      %v1503 = vmul.f32 %v1452, %v1452
      %v1504 = vmul.f32 %v1455, %v1455
      %v1505 = vmul.f32 %v1457, %v1457
      %v1506 = vmul.f32 %v1460, %v1460
      %v1507 = vmul.f32 %v1462, %v1462
      %v1508 = vsel %vm822, %v1500, 0.0
      %v1509 = vsel %vm822, %v1501, 0.0
      %v1510 = vadd.f32 %v1508, %v1509
      %v1511 = vrot.slane %v1510, 4
      %v1512 = vadd.f32 %v1510, %v1511
      %v1513 = vrot.slane %v1512, 2
      %v1514 = vadd.f32 %v1512, %v1513
      %v1515 = vrot.slane %v1514, 1
      %v1516 = vadd.f32 %v1514, %v1515
      %v1517 = vsel %vm822, %v1502, 0.0
      %v1518 = vsel %vm822, %v1503, 0.0
      %v1519 = vadd.f32 %v1517, %v1518
      %v1520 = vrot.slane %v1519, 4
      %v1521 = vadd.f32 %v1519, %v1520
      %v1522 = vrot.slane %v1521, 2
      %v1523 = vadd.f32 %v1521, %v1522
      %v1524 = vrot.slane %v1523, 1
      %v1525 = vadd.f32 %v1523, %v1524
      %v1526 = vsel %vm822, %v1504, 0.0
      %v1527 = vsel %vm822, %v1505, 0.0
      %v1528 = vadd.f32 %v1526, %v1527
      %v1529 = vrot.slane %v1528, 4
      %v1530 = vadd.f32 %v1528, %v1529
      %v1531 = vrot.slane %v1530, 2
      %v1532 = vadd.f32 %v1530, %v1531
      %v1533 = vrot.slane %v1532, 1
      %v1534 = vadd.f32 %v1532, %v1533
      %v1535 = vsel %vm822, %v1506, 0.0
      %v1536 = vsel %vm822, %v1507, 0.0
      %v1537 = vadd.f32 %v1535, %v1536
      %v1538 = vrot.slane %v1537, 4
      %v1539 = vadd.f32 %v1537, %v1538
      %v1540 = vrot.slane %v1539, 2
      %v1541 = vadd.f32 %v1539, %v1540
      %v1542 = vrot.slane %v1541, 1
      %v1543 = vadd.f32 %v1541, %v1542
      %v1548 = vsel %vm977, %v1481, %v1472
      %v1549 = vsel %vm979, %v1490, %v1548
      %v1550 = vsel %vm981, %v1499, %v1549
      %v1551 = vsel %vm822, %v1550, 0
      %1553 = vmatpush.msra.mxu0 0.0
      %1554 = vmatpush.msra.mxu0 0.0
      %1555 = vmatpush.msra.mxu0 0.0
      %1556 = vmatpush.msra.mxu0 0.0
      %1557 = vmatpush.msra.mxu0 0.0
      %1558 = vmatpush.msra.mxu0 0.0
      %1559 = vmatpush.msra.mxu0 0.0
      %1560 = vmatpush.msra.mxu0 0.0
      %1561 = vmatpush.msra.mxu0 0.0
      %1562 = vmatpush.msra.mxu0 0.0
      %1563 = vmatpush.msra.mxu0 0.0
      %1564 = vmatpush.msra.mxu0 0.0
      %1565 = vmatpush.msra.mxu0 0.0
      %1566 = vmatpush.msra.mxu0 0.0
      %1567 = vmatpush.msra.mxu0 %v593
      %1568 = vmatpush.msra.mxu0 %v592
      %1569 = vmatmul.f32.gmra.mxu0 %v1551
      %v1570 = vpop.f32.mrf.mxu0
      %v1571 = vadd.f32 0.0, %v1570
      %1572 = vdwg.mxu0
      %v1577 = vsel %vm977, %v1525, %v1516
      %v1578 = vsel %vm979, %v1534, %v1577
      %v1579 = vsel %vm981, %v1543, %v1578
      %v1580 = vsel %vm822, %v1579, 0
      %1582 = vmatpush.msra.mxu0 0.0
      %1583 = vmatpush.msra.mxu0 0.0
      %1584 = vmatpush.msra.mxu0 0.0
      %1585 = vmatpush.msra.mxu0 0.0
      %1586 = vmatpush.msra.mxu0 0.0
      %1587 = vmatpush.msra.mxu0 0.0
      %1588 = vmatpush.msra.mxu0 0.0
      %1589 = vmatpush.msra.mxu0 0.0
      %1590 = vmatpush.msra.mxu0 0.0
      %1591 = vmatpush.msra.mxu0 0.0
      %1592 = vmatpush.msra.mxu0 0.0
      %1593 = vmatpush.msra.mxu0 0.0
      %1594 = vmatpush.msra.mxu0 0.0
      %1595 = vmatpush.msra.mxu0 0.0
      %1596 = vmatpush.msra.mxu0 %v593
      %1597 = vmatpush.msra.mxu0 %v592
      %1598 = vmatmul.f32.gmra.mxu0 %v1580
      %v1599 = vpop.f32.mrf.mxu0
      %v1600 = vadd.f32 0.0, %v1599
      %1601 = vdwg.mxu0
      %v1602 = vmul.f32 %v1571, 0.03125
      %v1603 = vmul.f32 %v1600, 0.03125
      %v1604 = vmul.f32 %v1602, %v1602
      %v1605 = vsub.f32 %v1603, %v1604
      %v1606 = vmax.f32 %v1605, 0.0
      %v1607 = vadd.f32 %v1606, 1e-05
      %v1608 = vrsqrt.pop %v1607
      %v1609 = vmul.f32 %v1608, %v1607
      %v1610 = vmul.f32 %v1609, %v1608
      %v1611 = vmul.f32 0.5, %v1610
      %v1612 = vsub.f32 1.5, %v1611
      %v1613 = vmul.f32 %v1608, %v1612
      %vm1614 = vweird.f32 %v1607
      %vm1615 = vweird.f32 %v1608
      %vm1616 = vmor %vm1614, %vm1615
      %v1617 = vsel %vm1616, %v1608, %v1613
      %v1619 = vsel %vm813, %v1602, 0
      %1621 = vmatpush.msra.mxu0 0.0
      %1622 = vmatpush.msra.mxu0 0.0
      %1623 = vmatpush.msra.mxu0 0.0
      %1624 = vmatpush.msra.mxu0 0.0
      %1625 = vmatpush.msra.mxu0 0.0
      %1626 = vmatpush.msra.mxu0 0.0
      %1627 = vmatpush.msra.mxu0 0.0
      %1628 = vmatpush.msra.mxu0 0.0
      %1629 = vmatpush.msra.mxu0 0.0
      %1630 = vmatpush.msra.mxu0 0.0
      %1631 = vmatpush.msra.mxu0 0.0
      %1632 = vmatpush.msra.mxu0 0.0
      %1633 = vmatpush.msra.mxu0 0.0
      %1634 = vmatpush.msra.mxu0 0.0
      %1635 = vmatpush.msra.mxu0 0.0
      %1636 = vmatpush.msra.mxu0 %v594
      %1637 = vmatmul.f32.gmra.mxu0 %v1619
      %v1638 = vpop.f32.mrf.mxu0
      %v1639 = vadd.f32 0.0, %v1638
      %1640 = vdwg.mxu0
      %v1642 = vsel %vm813, %v1617, 0
      %1644 = vmatpush.msra.mxu0 0.0
      %1645 = vmatpush.msra.mxu0 0.0
      %1646 = vmatpush.msra.mxu0 0.0
      %1647 = vmatpush.msra.mxu0 0.0
      %1648 = vmatpush.msra.mxu0 0.0
      %1649 = vmatpush.msra.mxu0 0.0
      %1650 = vmatpush.msra.mxu0 0.0
      %1651 = vmatpush.msra.mxu0 0.0
      %1652 = vmatpush.msra.mxu0 0.0
      %1653 = vmatpush.msra.mxu0 0.0
      %1654 = vmatpush.msra.mxu0 0.0
      %1655 = vmatpush.msra.mxu0 0.0
      %1656 = vmatpush.msra.mxu0 0.0
      %1657 = vmatpush.msra.mxu0 0.0
      %1658 = vmatpush.msra.mxu0 0.0
      %1659 = vmatpush.msra.mxu0 %v594
      %1660 = vmatmul.f32.gmra.mxu0 %v1642
      %v1661 = vpop.f32.mrf.mxu0
      %v1662 = vadd.f32 0.0, %v1661
      %1663 = vdwg.mxu0
      %v1665 = vperm.slane %v1266, 0
      %v1667 = vmul.f32 %v1662, %v1665
      %v1668 = vmul.f32 %v1639, %v1667
      %v1670 = vperm.slane %v1267, 0
      %v1672 = vsub.f32 %v1670, %v1668
      %v1674 = vrot.slane %v1667, 1
      %v1675 = vrot.slane %v1667, 2
      %v1676 = vrot.slane %v1667, 3
      %v1677 = vperm.slane %v1667, 0
      %v1678 = vperm.slane %v1674, 0
      %v1679 = vperm.slane %v1675, 0
      %v1680 = vperm.slane %v1676, 0
      %v1685 = vmul.f32 %v1445, %v1677
      %v1686 = vmul.f32 %v1447, %v1677
      %v1687 = vmul.f32 %v1450, %v1678
      %v1688 = vmul.f32 %v1452, %v1678
      %v1689 = vmul.f32 %v1455, %v1679
      %v1690 = vmul.f32 %v1457, %v1679
      %v1691 = vmul.f32 %v1460, %v1680
      %v1692 = vmul.f32 %v1462, %v1680
      %v1694 = vrot.slane %v1672, 1
      %v1695 = vrot.slane %v1672, 2
      %v1696 = vrot.slane %v1672, 3
      %v1697 = vperm.slane %v1672, 0
      %v1698 = vperm.slane %v1694, 0
      %v1699 = vperm.slane %v1695, 0
      %v1700 = vperm.slane %v1696, 0
      %v1705 = vadd.f32 %v1685, %v1697
      %v1706 = vadd.f32 %v1686, %v1697
      %v1707 = vadd.f32 %v1687, %v1698
      %v1708 = vadd.f32 %v1688, %v1698
      %v1709 = vadd.f32 %v1689, %v1699
      %v1710 = vadd.f32 %v1690, %v1699
      %v1711 = vadd.f32 %v1691, %v1700
      %v1712 = vadd.f32 %v1692, %v1700
      %v1713 = vmin.f32 %v1705, 20.0
      %v1714 = vmin.f32 %v1706, 20.0
      %v1715 = vmin.f32 %v1707, 20.0
      %v1716 = vmin.f32 %v1708, 20.0
      %v1717 = vmin.f32 %v1709, 20.0
      %v1718 = vmin.f32 %v1710, 20.0
      %v1719 = vmin.f32 %v1711, 20.0
      %v1720 = vmin.f32 %v1712, 20.0
      %v1721 = vmul.f32 %v1713, 1.442695
      %v1722 = vpow.pop %v1721
      %v1723 = vmul.f32 %v1714, 1.442695
      %v1724 = vpow.pop %v1723
      %v1725 = vmul.f32 %v1715, 1.442695
      %v1726 = vpow.pop %v1725
      %v1727 = vmul.f32 %v1716, 1.442695
      %v1728 = vpow.pop %v1727
      %v1729 = vmul.f32 %v1717, 1.442695
      %v1730 = vpow.pop %v1729
      %v1731 = vmul.f32 %v1718, 1.442695
      %v1732 = vpow.pop %v1731
      %v1733 = vmul.f32 %v1719, 1.442695
      %v1734 = vpow.pop %v1733
      %v1735 = vmul.f32 %v1720, 1.442695
      %v1736 = vpow.pop %v1735
      %v1737 = vadd.f32 %v1722, 2.0
      %v1738 = vadd.f32 %v1724, 2.0
      %v1739 = vadd.f32 %v1726, 2.0
      %v1740 = vadd.f32 %v1728, 2.0
      %v1741 = vadd.f32 %v1730, 2.0
      %v1742 = vadd.f32 %v1732, 2.0
      %v1743 = vadd.f32 %v1734, 2.0
      %v1744 = vadd.f32 %v1736, 2.0
      %v1745 = vmul.f32 %v1722, %v1737
      %v1746 = vmul.f32 %v1724, %v1738
      %v1747 = vmul.f32 %v1726, %v1739
      %v1748 = vmul.f32 %v1728, %v1740
      %v1749 = vmul.f32 %v1730, %v1741
      %v1750 = vmul.f32 %v1732, %v1742
      %v1751 = vmul.f32 %v1734, %v1743
      %v1752 = vmul.f32 %v1736, %v1744
      %v1753 = vadd.f32 %v1745, 2.0
      %v1754 = vadd.f32 %v1746, 2.0
      %v1755 = vadd.f32 %v1747, 2.0
      %v1756 = vadd.f32 %v1748, 2.0
      %v1757 = vadd.f32 %v1749, 2.0
      %v1758 = vadd.f32 %v1750, 2.0
      %v1759 = vadd.f32 %v1751, 2.0
      %v1760 = vadd.f32 %v1752, 2.0
      %v1761 = vrcp.pop %v1753
      %v1762 = vrcp.pop %v1754
      %v1763 = vrcp.pop %v1755
      %v1764 = vrcp.pop %v1756
      %v1765 = vrcp.pop %v1757
      %v1766 = vrcp.pop %v1758
      %v1767 = vrcp.pop %v1759
      %v1768 = vrcp.pop %v1760
      %v1769 = vmul.f32 %v1745, %v1761
      %v1770 = vmul.f32 %v1746, %v1762
      %v1771 = vmul.f32 %v1747, %v1763
      %v1772 = vmul.f32 %v1748, %v1764
      %v1773 = vmul.f32 %v1749, %v1765
      %v1774 = vmul.f32 %v1750, %v1766
      %v1775 = vmul.f32 %v1751, %v1767
      %v1776 = vmul.f32 %v1752, %v1768
      %v1777 = vmul.f32 %v1705, %v1769
      %v1778 = vmul.f32 %v1706, %v1770
      %v1779 = vmul.f32 %v1707, %v1771
      %v1780 = vmul.f32 %v1708, %v1772
      %v1781 = vmul.f32 %v1709, %v1773
      %v1782 = vmul.f32 %v1710, %v1774
      %v1783 = vmul.f32 %v1711, %v1775
      %v1784 = vmul.f32 %v1712, %v1776
      %v1785 = vpack.c.bf16 %v585, %v584
      %v1786 = vpack.c.bf16 %v587, %v586
      %v1787 = vpack.c.bf16 %v589, %v588
      %v1788 = vpack.c.bf16 %v591, %v590
      %v1789 = vld [vmem:[%s15] sm:$0xf]
      %v1790 = vld [vmem:[%s16] sm:$0x1]
      %v1792 = vperm.slane %v1790, 0
      %v1795 = vsel %vm813, %v1785, 0
      %v1798 = vsel %vm813, %v1786, 0
      %v1801 = vsel %vm813, %v1787, 0
      %v1804 = vsel %vm813, %v1788, 0
      %v1807 = vsel %vm860, %v1789, 0
      %1809 = vmatpush.bf16.msra.mxu0 0
      %1810 = vmatpush.bf16.msra.mxu0 0
      %1811 = vmatpush.bf16.msra.mxu0 0
      %1812 = vmatpush.bf16.msra.mxu0 0
      %1813 = vmatpush.bf16.msra.mxu0 0
      %1814 = vmatpush.bf16.msra.mxu0 0
      %1815 = vmatpush.bf16.msra.mxu0 0
      %1816 = vmatpush.bf16.msra.mxu0 %v1807
      %1817 = vmatmul.bf16.gmra.mxu0 %v1795
      %v1818 = vpop.f32.mrf.mxu0
      %v1819 = vadd.f32 %v1792, %v1818
      %v1820 = vpop.f32.mrf.mxu0
      %v1821 = vadd.f32 %v1792, %v1820
      %1822 = vmatmul.bf16.gmra.mxu0 %v1798
      %v1823 = vpop.f32.mrf.mxu0
      %v1824 = vadd.f32 %v1792, %v1823
      %v1825 = vpop.f32.mrf.mxu0
      %v1826 = vadd.f32 %v1792, %v1825
      %1827 = vmatmul.bf16.gmra.mxu0 %v1801
      %v1828 = vpop.f32.mrf.mxu0
      %v1829 = vadd.f32 %v1792, %v1828
      %v1830 = vpop.f32.mrf.mxu0
      %v1831 = vadd.f32 %v1792, %v1830
      %1832 = vmatmul.bf16.gmra.mxu0 %v1804
      %v1833 = vpop.f32.mrf.mxu0
      %v1834 = vadd.f32 %v1792, %v1833
      %v1835 = vpop.f32.mrf.mxu0
      %v1836 = vadd.f32 %v1792, %v1835
      %1837 = vdwg.mxu0
      %v1838 = vadd.f32 %v1777, %v1819
      %v1839 = vadd.f32 %v1778, %v1821
      %v1840 = vadd.f32 %v1779, %v1824
      %v1841 = vadd.f32 %v1780, %v1826
      %v1842 = vadd.f32 %v1781, %v1829
      %v1843 = vadd.f32 %v1782, %v1831
      %v1844 = vadd.f32 %v1783, %v1834
      %v1845 = vadd.f32 %v1784, %v1836
      %1846 = vst.msk [vmem:[%s582] sm:$0xff] %vm822, %v1838
      %1847 = vst.msk [vmem:[%s582 + $0x8] sm:$0xff] %vm822, %v1839
      %1848 = vst.msk [vmem:[%s582 + $0x10] sm:$0xff] %vm822, %v1840
      %1849 = vst.msk [vmem:[%s582 + $0x18] sm:$0xff] %vm822, %v1841
      %1850 = vst.msk [vmem:[%s582 + $0x20] sm:$0xff] %vm822, %v1842
      %1851 = vst.msk [vmem:[%s582 + $0x28] sm:$0xff] %vm822, %v1843
      %1852 = vst.msk [vmem:[%s582 + $0x30] sm:$0xff] %vm822, %v1844
      %1853 = vst.msk [vmem:[%s582 + $0x38] sm:$0xff] %vm822, %v1845
      %p1854 = scmp.lt.s32.totalorder %s28, 1
      %s1855 = scalar_select %p1854, %s28, 1
      %s1856 = smul.addr %s1855, 8
      %s1857 = smul.addr %s1856, 8
      %s1858 = scalar_lea.vmem %s17, %s1857
      // Predicated region
      $region89: #{tpu_custom_call.1} parent=87 // pred_check
        %p1859 = pneg %p418
      $region90: #{tpu_custom_call.1} parent=87 // pred_check_branch
        %1861 = sbr.rel (%p1859) target = $region92
      $region91: #{tpu_custom_call.1} parent=87 // pred_region
        _
      $region92: #{tpu_custom_call.1} parent=87 // pred_fallthru
        _
    $region88: #{tpu_custom_call.1} parent=5 // pred_fallthru
      _
    %p1862 = scmp.le.s32.totalorder 2, %s23
    // Predicated region
    $region93: #{tpu_custom_call.1} parent=5 // pred_check
      %p1863 = pneg %p1862
    $region94: #{tpu_custom_call.1} parent=5 // pred_check_branch
      %1865 = sbr.rel (%p1863) target = $region96
    $region95: #{tpu_custom_call.1} parent=5 // pred_region
      %s1866 = ssub.s32 %s23, 2
      // Predicated region
      $region97: #{tpu_custom_call.1} parent=95 // pred_check
        %p1867 = pneg %p424
      $region98: #{tpu_custom_call.1} parent=95 // pred_check_branch
        %1869 = sbr.rel (%p1867) target = $region100
      $region99: #{tpu_custom_call.1} parent=95 // pred_region
        %p1870 = scmp.lt.s32.totalorder %s29, 1
        %s1871 = scalar_select %p1870, %s29, 1
        %s1872 = smul.addr %s1871, 8
        %s1873 = smul.addr %s1872, 8
        %s1874 = scalar_lea.vmem %s17, %s1873
      $region100: #{tpu_custom_call.1} parent=95 // pred_fallthru
        _
    $region96: #{tpu_custom_call.1} parent=5 // pred_fallthru
      _
  $region6: #{tpu_custom_call.1} parent=0 // loop_footer
    %s27 = sadd.s32 1, %s23
  $region7: #{tpu_custom_call.1} parent=0 // loop_footer_branch
    %22 = sbr.rel target = $region3
  $region8: #{tpu_custom_call.1} parent=0 // loop_exit
    _

</llo_original>
